<compile_context>
chip_gen: v5e
topology: v5e:2x2
jax: 0.10.0
libtpu: 0.0.40
codegen_flags: <defaults>
</compile_context>

<pallas_src>
import functools

import jax
import jax.numpy as jnp
from jax.experimental import pallas as pl
from jax.experimental.pallas import tpu as pltpu

EPS = 1e-5


# ---------------- fused Pallas kernel (hot path) ----------------

def _fused_block_kernel(H, W,
                        x_ref, w1_ref, b1_ref,
                        w2_ref, b2_ref,
                        w3_ref, b3_ref,
                        o_ref, hpad_ref):
    """One batch image per grid step; all intermediates stay in VMEM."""
    HW = x_ref.shape[1]
    Cm = w1_ref.shape[1]

    x2d = x_ref[0]                                    # (H*W, Cin) f32

    # ---- conv1 (1x1, BN1 scale pre-folded into w1) + shift + ReLU ------
    h1 = jnp.dot(x2d.astype(jnp.bfloat16), w1_ref[...],
                 preferred_element_type=jnp.float32)
    h1 = jnp.maximum(h1 + b1_ref[...], 0.0)                     # (H*W, Cm)

    # ---- conv2 (3x3, stride 1, pad 1, BN2 scale folded) + shift + ReLU -
    # Zero-padded VMEM copy of h1; taps grouped per kernel row -> 3 MXU
    # matmuls with contraction dim 3*Cm.
    hpad_ref[...] = jnp.zeros_like(hpad_ref)
    hpad_ref[1:H + 1, 1:W + 1, :] = h1.reshape(H, W, Cm)
    acc = None
    for dh in range(3):
        taps = [hpad_ref[dh:dh + H, dw:dw + W, :].reshape(HW, Cm)
                for dw in range(3)]
        tap_cat = jnp.concatenate(taps, axis=-1).astype(jnp.bfloat16)
        part = jnp.dot(tap_cat, w2_ref[dh],
                       preferred_element_type=jnp.float32)
        acc = part if acc is None else acc + part
    h2 = jnp.maximum(acc + b2_ref[...], 0.0)                    # (H*W, Cm)

    # ---- conv3 (1x1, BN3 scale folded) + shift + residual + ReLU -------
    y = jnp.dot(h2.astype(jnp.bfloat16), w3_ref[...],
                preferred_element_type=jnp.float32)
    o_ref[0] = jnp.maximum(y + b3_ref[...] + x2d, 0.0)


# ---------------- glue: layout / BN folding / pallas_call ----------------

def _fold_bn(gamma, beta, mean, var):
    scale = gamma / jnp.sqrt(var + EPS)
    shift = beta - mean * scale
    return scale.astype(jnp.float32), shift.astype(jnp.float32)


def block_forward(x_nchw, params, stride=1):
    """ResNet bottleneck block with identity_downsample=None (requires
    stride == 1 and in_channels == 4 * intermediate_channels)."""
    if stride != 1:
        raise ValueError("identity_downsample=None requires stride == 1")

    x = jnp.transpose(x_nchw, (0, 2, 3, 1)).astype(jnp.float32)  # NCHW -> NHWC
    N, H, W, Cin = x.shape
    Cm = params["conv1_w"].shape[0]
    Cout = params["conv3_w"].shape[0]
    if Cin != Cout:
        raise ValueError(
            "identity path requires in_channels == 4 * intermediate_channels")
    HW = H * W

    # Fold BN (inference mode); scales go straight into the bf16 weights.
    s1, b1 = _fold_bn(*params["bn1"])
    s2, b2 = _fold_bn(*params["bn2"])
    s3, b3 = _fold_bn(*params["bn3"])

    w1 = (params["conv1_w"].reshape(Cm, Cin).T * s1[None, :]).astype(jnp.bfloat16)  # (Cin, Cm)
    w2 = jnp.transpose(params["conv2_w"], (2, 3, 1, 0))          # (kh, kw, Cin, Cout)
    w2 = (w2 * s2[None, None, None, :]).reshape(3, 3 * Cm, Cm).astype(jnp.bfloat16)
    w3 = (params["conv3_w"].reshape(Cout, Cm).T * s3[None, :]).astype(jnp.bfloat16)  # (Cm, Cout)
    b1 = b1.reshape(1, Cm)
    b2 = b2.reshape(1, Cm)
    b3 = b3.reshape(1, Cout)

    x_flat = x.reshape(N, HW, Cin)

    # Per-grid-step VMEM footprint (x/out double-buffered by the pipeline);
    # v7x only has 64 MiB physical VMEM, so derive the scoped limit.
    per_step = (2 * HW * Cin * 4 + 2 * HW * Cout * 4             # streamed x + out
                + (H + 2) * (W + 2) * Cm * 4                     # padded-h1 scratch
                + 2 * (Cin * Cm + 9 * Cm * Cm + Cm * Cout) * 2   # resident bf16 weights
                + 4 * HW * Cm * 4 + HW * 3 * Cm * 2              # f32/bf16 temporaries
                + HW * Cout * 4)
    vmem_limit = int(min(max(3 * per_step, 16 * 2 ** 20), 64 * 2 ** 20))

    flops = 2 * N * HW * (Cin * Cm + 9 * Cm * Cm + Cm * Cout)
    bytes_accessed = (N * HW * Cin * 4 + N * HW * Cout * 4
                      + (w1.size + w2.size + w3.size) * 2
                      + (b1.size + b2.size + b3.size) * 4)

    const2 = lambda n: (0, 0)
    kernel = functools.partial(_fused_block_kernel, H, W)

    out = pl.pallas_call(
        kernel,
        out_shape=jax.ShapeDtypeStruct((N, HW, Cout), jnp.float32),
        grid=(N,),
        in_specs=[
            pl.BlockSpec((1, HW, Cin), lambda n: (n, 0, 0)),     # x: streamed per image
            pl.BlockSpec((Cin, Cm), const2),                     # w1 (BN1 scale folded)
            pl.BlockSpec((1, Cm), const2),                       # bn1 shift
            pl.BlockSpec((3, 3 * Cm, Cm), lambda n: (0, 0, 0)),  # w2 grouped by kernel row
            pl.BlockSpec((1, Cm), const2),                       # bn2 shift
            pl.BlockSpec((Cm, Cout), const2),                    # w3
            pl.BlockSpec((1, Cout), const2),                     # bn3 shift
        ],
        out_specs=pl.BlockSpec((1, HW, Cout), lambda n: (n, 0, 0)),
        scratch_shapes=[pltpu.VMEM((H + 2, W + 2, Cm), jnp.float32)],
        compiler_params=pltpu.CompilerParams(
            dimension_semantics=("parallel",),
            vmem_limit_bytes=vmem_limit,
        ),
        cost_estimate=pl.CostEstimate(
            flops=flops, transcendentals=0, bytes_accessed=bytes_accessed),
    )(x_flat, w1, b1, w2, b2, w3, b3)

    out = out.reshape(N, H, W, Cout)
    return jnp.transpose(out, (0, 3, 1, 2))                      # NHWC -> NCHW


# ---------------- pure-JAX reference (for self-check) ----------------

def _ref_block(x_nchw, params, stride=1):
    x = jnp.transpose(x_nchw, (0, 2, 3, 1)).astype(jnp.float32)

    def conv(h, w_oihw, s, pad):
        w = jnp.transpose(w_oihw, (2, 3, 1, 0))  # HWIO
        return jax.lax.conv_general_dilated(
            h, w, (s, s), [(pad, pad), (pad, pad)],
            dimension_numbers=("NHWC", "HWIO", "NHWC"))

    def bn(h, p):
        sc, sh = _fold_bn(*p)
        return h * sc + sh

    h = jax.nn.relu(bn(conv(x, params["conv1_w"], 1, 0), params["bn1"]))
    h = jax.nn.relu(bn(conv(h, params["conv2_w"], stride, 1), params["bn2"]))
    h = bn(conv(h, params["conv3_w"], 1, 0), params["bn3"])
    h = jax.nn.relu(h + x)
    return jnp.transpose(h, (0, 3, 1, 2))


# ---------------- deterministic params / main ----------------

def make_params(key, in_channels, intermediate_channels):
    exp = 4
    ks = jax.random.split(key, 6)

    def bn_params(k, c):
        k1, k2, k3 = jax.random.split(k, 3)
        gamma = 1.0 + 0.1 * jax.random.normal(k1, (c,), jnp.float32)
        beta = 0.1 * jax.random.normal(k2, (c,), jnp.float32)
        mean = 0.1 * jax.random.normal(k3, (c,), jnp.float32)
        var = jnp.ones((c,), jnp.float32)
        return (gamma, beta, mean, var)

    cm, co = intermediate_channels, intermediate_channels * exp
    return {
        "conv1_w": 0.1 * jax.random.normal(ks[0], (cm, in_channels, 1, 1), jnp.float32),
        "bn1": bn_params(ks[1], cm),
        "conv2_w": 0.1 * jax.random.normal(ks[2], (cm, cm, 3, 3), jnp.float32),
        "bn2": bn_params(ks[3], cm),
        "conv3_w": 0.1 * jax.random.normal(ks[4], (co, cm, 1, 1), jnp.float32),
        "bn3": bn_params(ks[5], co),
    }


if __name__ == "__main__":
    key = jax.random.PRNGKey(0)
    kx, kp = jax.random.split(key)

    # in_channels = intermediate_channels * 4, stride = 1 -> identity_downsample=None
    N, Cin, H, W = 2, 16, 16, 16
    Cm = 4
    x = jax.random.normal(kx, (N, Cin, H, W), jnp.float32)
    params = make_params(kp, Cin, Cm)

    fwd = jax.jit(block_forward, static_argnames=("stride",))
    out = jax.block_until_ready(fwd(x, params, stride=1))
    ref = jax.block_until_ready(_ref_block(x, params, stride=1))

    assert out.shape == (N, Cin, H, W)
    # bf16 MXU operands (f32 accumulation) -> slightly loosened tolerance.
    assert jnp.allclose(out, ref, rtol=2e-2, atol=2e-2), "mismatch vs reference"

    print("KERNEL_OK")
</pallas_src>

<mosaic_0001>
module attributes {stable_mosaic.version = 11 : i64} {
  func.func @_fused_block_kernel(%arg0: i32, %arg1: memref<1x256x16xf32, #tpu.memory_space<vmem>>, %arg2: memref<16x4xbf16, #tpu.memory_space<vmem>>, %arg3: memref<1x4xf32, #tpu.memory_space<vmem>>, %arg4: memref<3x12x4xbf16, #tpu.memory_space<vmem>>, %arg5: memref<1x4xf32, #tpu.memory_space<vmem>>, %arg6: memref<4x16xbf16, #tpu.memory_space<vmem>>, %arg7: memref<1x16xf32, #tpu.memory_space<vmem>>, %arg8: memref<1x256x16xf32, #tpu.memory_space<vmem>>, %arg9: memref<18x18x4xf32, #tpu.memory_space<vmem>>) attributes {dimension_semantics = [#tpu.dimension_semantics<parallel>], iteration_bounds = array<i64: 2>, scalar_prefetch = 0 : i64, scratch_operands = 1 : i64, tpu.core_type = #tpu.core_type<tc>, window_params = [{transform_indices = @transform_0, window_bounds = array<i64: 1, 256, 16>}, {pipeline_mode = #tpu.pipeline_mode<synchronous>, transform_indices = @transform_1, window_bounds = array<i64: 16, 4>}, {pipeline_mode = #tpu.pipeline_mode<synchronous>, transform_indices = @transform_2, window_bounds = array<i64: 1, 4>}, {pipeline_mode = #tpu.pipeline_mode<synchronous>, transform_indices = @transform_3, window_bounds = array<i64: 3, 12, 4>}, {pipeline_mode = #tpu.pipeline_mode<synchronous>, transform_indices = @transform_4, window_bounds = array<i64: 1, 4>}, {pipeline_mode = #tpu.pipeline_mode<synchronous>, transform_indices = @transform_5, window_bounds = array<i64: 4, 16>}, {pipeline_mode = #tpu.pipeline_mode<synchronous>, transform_indices = @transform_6, window_bounds = array<i64: 1, 16>}, {transform_indices = @transform_7, window_bounds = array<i64: 1, 256, 16>}]} {
    %c0 = arith.constant 0 : index
    %c0_0 = arith.constant 0 : index
    %c0_1 = arith.constant 0 : index
    %0 = vector.load %arg1[%c0, %c0_0, %c0_1] : memref<1x256x16xf32, #tpu.memory_space<vmem>>, vector<1x256x16xf32>
    %1 = vector.shape_cast %0 : vector<1x256x16xf32> to vector<256x16xf32>
    %2 = arith.truncf %1 : vector<256x16xf32> to vector<256x16xbf16>
    %c0_2 = arith.constant 0 : index
    %c0_3 = arith.constant 0 : index
    %3 = vector.load %arg2[%c0_2, %c0_3] : memref<16x4xbf16, #tpu.memory_space<vmem>>, vector<16x4xbf16>
    %cst = arith.constant dense<0.000000e+00> : vector<256x4xf32>
    %4 = tpu.matmul %2, %3, %cst {dimension_numbers = #tpu.dot_dimension_numbers<[1], [0], [0], [1], [0, 0, 1, 1], [], []>} : vector<256x16xbf16>, vector<16x4xbf16>, vector<256x4xf32> -> vector<256x4xf32>
    %c0_4 = arith.constant 0 : index
    %c0_5 = arith.constant 0 : index
    %5 = vector.load %arg3[%c0_4, %c0_5] : memref<1x4xf32, #tpu.memory_space<vmem>>, vector<1x4xf32>
    %6 = vector.broadcast %5 : vector<1x4xf32> to vector<256x4xf32>
    %7 = arith.addf %4, %6 : vector<256x4xf32>
    %cst_6 = arith.constant 0.000000e+00 : f32
    %8 = vector.broadcast %cst_6 : f32 to vector<256x4xf32>
    %9 = arith.maximumf %7, %8 : vector<256x4xf32>
    %cst_7 = arith.constant 0.000000e+00 : f32
    %10 = vector.broadcast %cst_7 : f32 to vector<18x18x4xf32>
    %c0_8 = arith.constant 0 : index
    %c0_9 = arith.constant 0 : index
    %c0_10 = arith.constant 0 : index
    %11 = vector.load %arg9[%c0_8, %c0_9, %c0_10] : memref<18x18x4xf32, #tpu.memory_space<vmem>>, vector<18x18x4xf32>
    tpu.vector_store %arg9[%c0_8, %c0_9, %c0_10], %10 {strides = array<i32>} : memref<18x18x4xf32, #tpu.memory_space<vmem>>, vector<18x18x4xf32>,
    %12 = vector.shape_cast %9 : vector<256x4xf32> to vector<16x16x4xf32>
    %c1 = arith.constant 1 : index
    %c1_11 = arith.constant 1 : index
    %c0_12 = arith.constant 0 : index
    %13 = vector.load %arg9[%c1, %c1_11, %c0_12] : memref<18x18x4xf32, #tpu.memory_space<vmem>>, vector<16x16x4xf32>
    tpu.vector_store %arg9[%c1, %c1_11, %c0_12], %12 {strides = array<i32>} : memref<18x18x4xf32, #tpu.memory_space<vmem>>, vector<16x16x4xf32>,
    %c0_13 = arith.constant 0 : index
    %c0_14 = arith.constant 0 : index
    %c0_15 = arith.constant 0 : index
    %14 = vector.load %arg9[%c0_13, %c0_14, %c0_15] : memref<18x18x4xf32, #tpu.memory_space<vmem>>, vector<16x16x4xf32>
    %15 = vector.shape_cast %14 : vector<16x16x4xf32> to vector<256x4xf32>
    %c0_16 = arith.constant 0 : index
    %c1_17 = arith.constant 1 : index
    %c0_18 = arith.constant 0 : index
    %16 = vector.load %arg9[%c0_16, %c1_17, %c0_18] : memref<18x18x4xf32, #tpu.memory_space<vmem>>, vector<16x16x4xf32>
    %17 = vector.shape_cast %16 : vector<16x16x4xf32> to vector<256x4xf32>
    %c0_19 = arith.constant 0 : index
    %c2 = arith.constant 2 : index
    %c0_20 = arith.constant 0 : index
    %18 = vector.load %arg9[%c0_19, %c2, %c0_20] : memref<18x18x4xf32, #tpu.memory_space<vmem>>, vector<16x16x4xf32>
    %19 = vector.shape_cast %18 : vector<16x16x4xf32> to vector<256x4xf32>
    %20 = tpu.concatenate %15, %17, %19 in 1 : vector<256x4xf32>, vector<256x4xf32>, vector<256x4xf32> -> vector<256x12xf32>
    %21 = arith.truncf %20 : vector<256x12xf32> to vector<256x12xbf16>
    %c0_21 = arith.constant 0 : index
    %c0_22 = arith.constant 0 : index
    %c0_23 = arith.constant 0 : index
    %22 = vector.load %arg4[%c0_21, %c0_22, %c0_23] : memref<3x12x4xbf16, #tpu.memory_space<vmem>>, vector<1x12x4xbf16>
    %23 = vector.shape_cast %22 : vector<1x12x4xbf16> to vector<12x4xbf16>
    %cst_24 = arith.constant dense<0.000000e+00> : vector<256x4xf32>
    %24 = tpu.matmul %21, %23, %cst_24 {dimension_numbers = #tpu.dot_dimension_numbers<[1], [0], [0], [1], [0, 0, 1, 1], [], []>} : vector<256x12xbf16>, vector<12x4xbf16>, vector<256x4xf32> -> vector<256x4xf32>
    %c1_25 = arith.constant 1 : index
    %c0_26 = arith.constant 0 : index
    %c0_27 = arith.constant 0 : index
    %25 = vector.load %arg9[%c1_25, %c0_26, %c0_27] : memref<18x18x4xf32, #tpu.memory_space<vmem>>, vector<16x16x4xf32>
    %26 = vector.shape_cast %25 : vector<16x16x4xf32> to vector<256x4xf32>
    %c1_28 = arith.constant 1 : index
    %c1_29 = arith.constant 1 : index
    %c0_30 = arith.constant 0 : index
    %27 = vector.load %arg9[%c1_28, %c1_29, %c0_30] : memref<18x18x4xf32, #tpu.memory_space<vmem>>, vector<16x16x4xf32>
    %28 = vector.shape_cast %27 : vector<16x16x4xf32> to vector<256x4xf32>
    %c1_31 = arith.constant 1 : index
    %c2_32 = arith.constant 2 : index
    %c0_33 = arith.constant 0 : index
    %29 = vector.load %arg9[%c1_31, %c2_32, %c0_33] : memref<18x18x4xf32, #tpu.memory_space<vmem>>, vector<16x16x4xf32>
    %30 = vector.shape_cast %29 : vector<16x16x4xf32> to vector<256x4xf32>
    %31 = tpu.concatenate %26, %28, %30 in 1 : vector<256x4xf32>, vector<256x4xf32>, vector<256x4xf32> -> vector<256x12xf32>
    %32 = arith.truncf %31 : vector<256x12xf32> to vector<256x12xbf16>
    %c1_34 = arith.constant 1 : index
    %c0_35 = arith.constant 0 : index
    %c0_36 = arith.constant 0 : index
    %33 = vector.load %arg4[%c1_34, %c0_35, %c0_36] : memref<3x12x4xbf16, #tpu.memory_space<vmem>>, vector<1x12x4xbf16>
    %34 = vector.shape_cast %33 : vector<1x12x4xbf16> to vector<12x4xbf16>
    %cst_37 = arith.constant dense<0.000000e+00> : vector<256x4xf32>
    %35 = tpu.matmul %32, %34, %cst_37 {dimension_numbers = #tpu.dot_dimension_numbers<[1], [0], [0], [1], [0, 0, 1, 1], [], []>} : vector<256x12xbf16>, vector<12x4xbf16>, vector<256x4xf32> -> vector<256x4xf32>
    %36 = arith.addf %24, %35 : vector<256x4xf32>
    %c2_38 = arith.constant 2 : index
    %c0_39 = arith.constant 0 : index
    %c0_40 = arith.constant 0 : index
    %37 = vector.load %arg9[%c2_38, %c0_39, %c0_40] : memref<18x18x4xf32, #tpu.memory_space<vmem>>, vector<16x16x4xf32>
    %38 = vector.shape_cast %37 : vector<16x16x4xf32> to vector<256x4xf32>
    %c2_41 = arith.constant 2 : index
    %c1_42 = arith.constant 1 : index
    %c0_43 = arith.constant 0 : index
    %39 = vector.load %arg9[%c2_41, %c1_42, %c0_43] : memref<18x18x4xf32, #tpu.memory_space<vmem>>, vector<16x16x4xf32>
    %40 = vector.shape_cast %39 : vector<16x16x4xf32> to vector<256x4xf32>
    %c2_44 = arith.constant 2 : index
    %c2_45 = arith.constant 2 : index
    %c0_46 = arith.constant 0 : index
    %41 = vector.load %arg9[%c2_44, %c2_45, %c0_46] : memref<18x18x4xf32, #tpu.memory_space<vmem>>, vector<16x16x4xf32>
    %42 = vector.shape_cast %41 : vector<16x16x4xf32> to vector<256x4xf32>
    %43 = tpu.concatenate %38, %40, %42 in 1 : vector<256x4xf32>, vector<256x4xf32>, vector<256x4xf32> -> vector<256x12xf32>
    %44 = arith.truncf %43 : vector<256x12xf32> to vector<256x12xbf16>
    %c2_47 = arith.constant 2 : index
    %c0_48 = arith.constant 0 : index
    %c0_49 = arith.constant 0 : index
    %45 = vector.load %arg4[%c2_47, %c0_48, %c0_49] : memref<3x12x4xbf16, #tpu.memory_space<vmem>>, vector<1x12x4xbf16>
    %46 = vector.shape_cast %45 : vector<1x12x4xbf16> to vector<12x4xbf16>
    %cst_50 = arith.constant dense<0.000000e+00> : vector<256x4xf32>
    %47 = tpu.matmul %44, %46, %cst_50 {dimension_numbers = #tpu.dot_dimension_numbers<[1], [0], [0], [1], [0, 0, 1, 1], [], []>} : vector<256x12xbf16>, vector<12x4xbf16>, vector<256x4xf32> -> vector<256x4xf32>
    %48 = arith.addf %36, %47 : vector<256x4xf32>
    %c0_51 = arith.constant 0 : index
    %c0_52 = arith.constant 0 : index
    %49 = vector.load %arg5[%c0_51, %c0_52] : memref<1x4xf32, #tpu.memory_space<vmem>>, vector<1x4xf32>
    %50 = vector.broadcast %49 : vector<1x4xf32> to vector<256x4xf32>
    %51 = arith.addf %48, %50 : vector<256x4xf32>
    %cst_53 = arith.constant 0.000000e+00 : f32
    %52 = vector.broadcast %cst_53 : f32 to vector<256x4xf32>
    %53 = arith.maximumf %51, %52 : vector<256x4xf32>
    %54 = arith.truncf %53 : vector<256x4xf32> to vector<256x4xbf16>
    %c0_54 = arith.constant 0 : index
    %c0_55 = arith.constant 0 : index
    %55 = vector.load %arg6[%c0_54, %c0_55] : memref<4x16xbf16, #tpu.memory_space<vmem>>, vector<4x16xbf16>
    %cst_56 = arith.constant dense<0.000000e+00> : vector<256x16xf32>
    %56 = tpu.matmul %54, %55, %cst_56 {dimension_numbers = #tpu.dot_dimension_numbers<[1], [0], [0], [1], [0, 0, 1, 1], [], []>} : vector<256x4xbf16>, vector<4x16xbf16>, vector<256x16xf32> -> vector<256x16xf32>
    %c0_57 = arith.constant 0 : index
    %c0_58 = arith.constant 0 : index
    %57 = vector.load %arg7[%c0_57, %c0_58] : memref<1x16xf32, #tpu.memory_space<vmem>>, vector<1x16xf32>
    %58 = vector.broadcast %57 : vector<1x16xf32> to vector<256x16xf32>
    %59 = arith.addf %56, %58 : vector<256x16xf32>
    %60 = arith.addf %59, %1 : vector<256x16xf32>
    %cst_59 = arith.constant 0.000000e+00 : f32
    %61 = vector.broadcast %cst_59 : f32 to vector<256x16xf32>
    %62 = arith.maximumf %60, %61 : vector<256x16xf32>
    %c0_60 = arith.constant 0 : index
    %c0_61 = arith.constant 0 : index
    %c0_62 = arith.constant 0 : index
    %63 = vector.load %arg8[%c0_60, %c0_61, %c0_62] : memref<1x256x16xf32, #tpu.memory_space<vmem>>, vector<1x256x16xf32>
    %64 = vector.shape_cast %63 : vector<1x256x16xf32> to vector<256x16xf32>
    %65 = vector.shape_cast %62 : vector<256x16xf32> to vector<1x256x16xf32>
    tpu.vector_store %arg8[%c0_60, %c0_61, %c0_62], %65 {strides = array<i32>} : memref<1x256x16xf32, #tpu.memory_space<vmem>>, vector<1x256x16xf32>,
    return
  }
  func.func @transform_0(%arg0: i32) -> (i32, i32, i32) {
    %c0_i32 = arith.constant 0 : i32
    %c0_i32_0 = arith.constant 0 : i32
    %c0_i32_1 = arith.constant 0 : i32
    return %arg0, %c0_i32, %c0_i32_0 : i32, i32, i32
  }
  func.func @transform_1(%arg0: i32) -> (i32, i32) {
    %c0_i32 = arith.constant 0 : i32
    %c0_i32_0 = arith.constant 0 : i32
    %c0_i32_1 = arith.constant 0 : i32
    return %c0_i32, %c0_i32_0 : i32, i32
  }
  func.func @transform_2(%arg0: i32) -> (i32, i32) {
    %c0_i32 = arith.constant 0 : i32
    %c0_i32_0 = arith.constant 0 : i32
    %c0_i32_1 = arith.constant 0 : i32
    return %c0_i32, %c0_i32_0 : i32, i32
  }
  func.func @transform_3(%arg0: i32) -> (i32, i32, i32) {
    %c0_i32 = arith.constant 0 : i32
    %c0_i32_0 = arith.constant 0 : i32
    %c0_i32_1 = arith.constant 0 : i32
    %c0_i32_2 = arith.constant 0 : i32
    return %c0_i32, %c0_i32_0, %c0_i32_1 : i32, i32, i32
  }
  func.func @transform_4(%arg0: i32) -> (i32, i32) {
    %c0_i32 = arith.constant 0 : i32
    %c0_i32_0 = arith.constant 0 : i32
    %c0_i32_1 = arith.constant 0 : i32
    return %c0_i32, %c0_i32_0 : i32, i32
  }
  func.func @transform_5(%arg0: i32) -> (i32, i32) {
    %c0_i32 = arith.constant 0 : i32
    %c0_i32_0 = arith.constant 0 : i32
    %c0_i32_1 = arith.constant 0 : i32
    return %c0_i32, %c0_i32_0 : i32, i32
  }
  func.func @transform_6(%arg0: i32) -> (i32, i32) {
    %c0_i32 = arith.constant 0 : i32
    %c0_i32_0 = arith.constant 0 : i32
    %c0_i32_1 = arith.constant 0 : i32
    return %c0_i32, %c0_i32_0 : i32, i32
  }
  func.func @transform_7(%arg0: i32) -> (i32, i32, i32) {
    %c0_i32 = arith.constant 0 : i32
    %c0_i32_0 = arith.constant 0 : i32
    %c0_i32_1 = arith.constant 0 : i32
    return %arg0, %c0_i32, %c0_i32_0 : i32, i32, i32
  }
}

</mosaic_0001>

<llo_original>
// kernel: block_forward.1
$region0: #{block_forward.1}
  #allocation0 [shape = 'u32[]', space=smem, size = 0x4, offset = 0x4, fixed_abs, tag = 'smem constant byte address 0x4 - core index']
  #allocation1 [shape = 'u32[72,128]{1,0:T(1,128)}', space=vmem, size = 0x9000, scoped, tag = 'internal scratch']
  #allocation2 [shape = 'f32[18,18,4]{2,1,0:T(8,128)}', space=vmem, size = 0x36000, scoped, tag = 'scratch operand']
  %s0 = inlined_call_operand.vmem [shape: f32[2,256,16], index: 0, kind: input, shape index: {}]
  %s1 = inlined_call_operand.vmem [shape: bf16[16,4], index: 1, kind: input, shape index: {}]
  %s2 = inlined_call_operand.vmem [shape: f32[1,4], index: 2, kind: input, shape index: {}]
  %s3 = inlined_call_operand.vmem [shape: bf16[3,12,4], index: 3, kind: input, shape index: {}]
  %s4 = inlined_call_operand.vmem [shape: f32[1,4], index: 4, kind: input, shape index: {}]
  %s5 = inlined_call_operand.vmem [shape: bf16[4,16], index: 5, kind: input, shape index: {}]
  %s6 = inlined_call_operand.vmem [shape: f32[1,16], index: 6, kind: input, shape index: {}]
  %s7 = inlined_call_operand.vmem [shape: f32[2,256,16], index: 7, kind: output, shape index: {}]
  %s8 = sld [smem:[#allocation0]]
  $region61: #{block_forward.1} parent=0
    _
  %s10 = ssub.s32 1, %s8
  %s11 = scalar_select 0, %s10, %s8
  loop: start=0, step=1, limit=4
  $region2: #{block_forward.1} parent=0 // loop_pre_header
    _
  $region3: #{block_forward.1} parent=0 // loop_header
    %s13 = sphi 0, %s17
    %p14 = scmp.ge.s32.totalorder %s13, 4
    %s23 = sphi 0, %s25
    %s26 = sphi 0, %s23
    %s27 = sphi 0, %s26
    %s43 = sphi 0, %s27
    %s47 = sphi 0, %s47
    %s49 = sphi 0, %s47
    %s50 = sphi 0, %s49
    %s64 = sphi 0, %s50
    %s68 = sphi 0, %s68
    %s70 = sphi 0, %s68
    %s71 = sphi 0, %s70
    %s85 = sphi 0, %s71
    %s89 = sphi 0, %s89
    %s91 = sphi 0, %s89
    %s92 = sphi 0, %s91
    %s106 = sphi 0, %s92
    %s110 = sphi 0, %s110
    %s112 = sphi 0, %s110
    %s113 = sphi 0, %s112
    %s127 = sphi 0, %s113
    %s131 = sphi 0, %s131
    %s133 = sphi 0, %s131
    %s134 = sphi 0, %s133
    %s148 = sphi 0, %s134
    %s152 = sphi 0, %s152
    %s154 = sphi 0, %s152
    %s155 = sphi 0, %s154
    %s169 = sphi 0, %s155
    %s175 = sphi 0, %s177
    %s178 = sphi 0, %s175
    %s179 = sphi 0, %s178
    %s195 = sphi 0, %s179
  $region4: #{block_forward.1} parent=0 // loop_header_branch
    %16 = sbr.rel (%p14) target = $region8
  $region5: #{block_forward.1} parent=0 // loop_body
    %s18 = ssub.s32 %s13, 1
    %s19 = ssub.s32 %s13, 2
    %s20 = sadd.s32 %s13, 1
    %s21 = ssub.s32 %s13, %s20
    %p22 = scmp.eq.s32.totalorder %s21, 0
    %s24 = sadd.s32 %s23, 1
    %s25 = scalar_select %p22, %s23, %s24
    %p28 = pneg %p22
    %p29 = scmp.eq.s32.totalorder %s13, 1
    %p30 = por %p28, %p29
    %p31 = scmp.ne.s32.totalorder %s23, %s26
    %p32 = scmp.eq.s32.totalorder %s13, 0
    %p33 = por %p31, %p32
    %p34 = scmp.ne.s32.totalorder %s23, %s26
    %p35 = scmp.eq.s32.totalorder %s18, 1
    %p36 = por %p34, %p35
    %p37 = scmp.ne.s32.totalorder %s26, %s27
    %p38 = scmp.eq.s32.totalorder %s18, 0
    %p39 = por %p37, %p38
    %p40 = scmp.ne.s32.totalorder %s26, %s27
    %p41 = scmp.eq.s32.totalorder %s19, 1
    %p42 = por %p40, %p41
    %p44 = scmp.ne.s32.totalorder %s27, %s43
    %p45 = scmp.eq.s32.totalorder %s19, 0
    %p46 = por %p44, %p45
    %s48 = sadd.s32 %s47, 1
    %p51 = scmp.eq.s32.totalorder %s13, 1
    %p52 = scmp.ne.s32.totalorder %s47, %s49
    %p53 = scmp.eq.s32.totalorder %s13, 0
    %p54 = por %p52, %p53
    %p55 = scmp.ne.s32.totalorder %s47, %s49
    %p56 = scmp.eq.s32.totalorder %s18, 1
    %p57 = por %p55, %p56
    %p58 = scmp.ne.s32.totalorder %s49, %s50
    %p59 = scmp.eq.s32.totalorder %s18, 0
    %p60 = por %p58, %p59
    %p61 = scmp.ne.s32.totalorder %s49, %s50
    %p62 = scmp.eq.s32.totalorder %s19, 1
    %p63 = por %p61, %p62
    %p65 = scmp.ne.s32.totalorder %s50, %s64
    %p66 = scmp.eq.s32.totalorder %s19, 0
    %p67 = por %p65, %p66
    %s69 = sadd.s32 %s68, 1
    %p72 = scmp.eq.s32.totalorder %s13, 1
    %p73 = scmp.ne.s32.totalorder %s68, %s70
    %p74 = scmp.eq.s32.totalorder %s13, 0
    %p75 = por %p73, %p74
    %p76 = scmp.ne.s32.totalorder %s68, %s70
    %p77 = scmp.eq.s32.totalorder %s18, 1
    %p78 = por %p76, %p77
    %p79 = scmp.ne.s32.totalorder %s70, %s71
    %p80 = scmp.eq.s32.totalorder %s18, 0
    %p81 = por %p79, %p80
    %p82 = scmp.ne.s32.totalorder %s70, %s71
    %p83 = scmp.eq.s32.totalorder %s19, 1
    %p84 = por %p82, %p83
    %p86 = scmp.ne.s32.totalorder %s71, %s85
    %p87 = scmp.eq.s32.totalorder %s19, 0
    %p88 = por %p86, %p87
    %s90 = sadd.s32 %s89, 1
    %p93 = scmp.eq.s32.totalorder %s13, 1
    %p94 = scmp.ne.s32.totalorder %s89, %s91
    %p95 = scmp.eq.s32.totalorder %s13, 0
    %p96 = por %p94, %p95
    %p97 = scmp.ne.s32.totalorder %s89, %s91
    %p98 = scmp.eq.s32.totalorder %s18, 1
    %p99 = por %p97, %p98
    %p100 = scmp.ne.s32.totalorder %s91, %s92
    %p101 = scmp.eq.s32.totalorder %s18, 0
    %p102 = por %p100, %p101
    %p103 = scmp.ne.s32.totalorder %s91, %s92
    %p104 = scmp.eq.s32.totalorder %s19, 1
    %p105 = por %p103, %p104
    %p107 = scmp.ne.s32.totalorder %s92, %s106
    %p108 = scmp.eq.s32.totalorder %s19, 0
    %p109 = por %p107, %p108
    %s111 = sadd.s32 %s110, 1
    %p114 = scmp.eq.s32.totalorder %s13, 1
    %p115 = scmp.ne.s32.totalorder %s110, %s112
    %p116 = scmp.eq.s32.totalorder %s13, 0
    %p117 = por %p115, %p116
    %p118 = scmp.ne.s32.totalorder %s110, %s112
    %p119 = scmp.eq.s32.totalorder %s18, 1
    %p120 = por %p118, %p119
    %p121 = scmp.ne.s32.totalorder %s112, %s113
    %p122 = scmp.eq.s32.totalorder %s18, 0
    %p123 = por %p121, %p122
    %p124 = scmp.ne.s32.totalorder %s112, %s113
    %p125 = scmp.eq.s32.totalorder %s19, 1
    %p126 = por %p124, %p125
    %p128 = scmp.ne.s32.totalorder %s113, %s127
    %p129 = scmp.eq.s32.totalorder %s19, 0
    %p130 = por %p128, %p129
    %s132 = sadd.s32 %s131, 1
    %p135 = scmp.eq.s32.totalorder %s13, 1
    %p136 = scmp.ne.s32.totalorder %s131, %s133
    %p137 = scmp.eq.s32.totalorder %s13, 0
    %p138 = por %p136, %p137
    %p139 = scmp.ne.s32.totalorder %s131, %s133
    %p140 = scmp.eq.s32.totalorder %s18, 1
    %p141 = por %p139, %p140
    %p142 = scmp.ne.s32.totalorder %s133, %s134
    %p143 = scmp.eq.s32.totalorder %s18, 0
    %p144 = por %p142, %p143
    %p145 = scmp.ne.s32.totalorder %s133, %s134
    %p146 = scmp.eq.s32.totalorder %s19, 1
    %p147 = por %p145, %p146
    %p149 = scmp.ne.s32.totalorder %s134, %s148
    %p150 = scmp.eq.s32.totalorder %s19, 0
    %p151 = por %p149, %p150
    %s153 = sadd.s32 %s152, 1
    %p156 = scmp.eq.s32.totalorder %s13, 1
    %p157 = scmp.ne.s32.totalorder %s152, %s154
    %p158 = scmp.eq.s32.totalorder %s13, 0
    %p159 = por %p157, %p158
    %p160 = scmp.ne.s32.totalorder %s152, %s154
    %p161 = scmp.eq.s32.totalorder %s18, 1
    %p162 = por %p160, %p161
    %p163 = scmp.ne.s32.totalorder %s154, %s155
    %p164 = scmp.eq.s32.totalorder %s18, 0
    %p165 = por %p163, %p164
    %p166 = scmp.ne.s32.totalorder %s154, %s155
    %p167 = scmp.eq.s32.totalorder %s19, 1
    %p168 = por %p166, %p167
    %p170 = scmp.ne.s32.totalorder %s155, %s169
    %p171 = scmp.eq.s32.totalorder %s19, 0
    %p172 = por %p170, %p171
    %s173 = ssub.s32 %s13, %s20
    %p174 = scmp.eq.s32.totalorder %s173, 0
    %s176 = sadd.s32 %s175, 1
    %s177 = scalar_select %p174, %s175, %s176
    %p180 = pneg %p174
    %p181 = scmp.eq.s32.totalorder %s13, 1
    %p182 = por %p180, %p181
    %p183 = scmp.ne.s32.totalorder %s175, %s178
    %p184 = scmp.eq.s32.totalorder %s13, 0
    %p185 = por %p183, %p184
    %p186 = scmp.ne.s32.totalorder %s175, %s178
    %p187 = scmp.eq.s32.totalorder %s18, 1
    %p188 = por %p186, %p187
    %p189 = scmp.ne.s32.totalorder %s178, %s179
    %p190 = scmp.eq.s32.totalorder %s18, 0
    %p191 = por %p189, %p190
    %p192 = scmp.ne.s32.totalorder %s178, %s179
    %p193 = scmp.eq.s32.totalorder %s19, 1
    %p194 = por %p192, %p193
    %p196 = scmp.ne.s32.totalorder %s179, %s195
    %p197 = scmp.eq.s32.totalorder %s19, 0
    %p198 = por %p196, %p197
    %p199 = scmp.le.s32.totalorder 1, %s13
    %p200 = scmp.lt.s32.totalorder %s13, 3
    %p201 = pnand %p199, %p200
    %p202 = pneg %p201
    // Predicated region
    $region9: #{block_forward.1} parent=5 // pred_check
      _
    $region10: #{block_forward.1} parent=5 // pred_check_branch
      %204 = sbr.rel (%p201) target = $region12
    $region11: #{block_forward.1} parent=5 // pred_region
      %s205 = ssub.s32 %s13, 1
      // Predicated region
      $region13: #{block_forward.1} parent=11 // pred_check
        %p206 = pneg %p60
      $region14: #{block_forward.1} parent=11 // pred_check_branch
        %208 = sbr.rel (%p206) target = $region16
      $region15: #{block_forward.1} parent=11 // pred_region
        _
      $region16: #{block_forward.1} parent=11 // pred_fallthru
        _
      // Predicated region
      $region17: #{block_forward.1} parent=11 // pred_check
        %p209 = pneg %p81
      $region18: #{block_forward.1} parent=11 // pred_check_branch
        %211 = sbr.rel (%p209) target = $region20
      $region19: #{block_forward.1} parent=11 // pred_region
        _
      $region20: #{block_forward.1} parent=11 // pred_fallthru
        _
      // Predicated region
      $region21: #{block_forward.1} parent=11 // pred_check
        %p212 = pneg %p102
      $region22: #{block_forward.1} parent=11 // pred_check_branch
        %214 = sbr.rel (%p212) target = $region24
      $region23: #{block_forward.1} parent=11 // pred_region
        _
      $region24: #{block_forward.1} parent=11 // pred_fallthru
        _
      // Predicated region
      $region25: #{block_forward.1} parent=11 // pred_check
        %p215 = pneg %p123
      $region26: #{block_forward.1} parent=11 // pred_check_branch
        %217 = sbr.rel (%p215) target = $region28
      $region27: #{block_forward.1} parent=11 // pred_region
        _
      $region28: #{block_forward.1} parent=11 // pred_fallthru
        _
      // Predicated region
      $region29: #{block_forward.1} parent=11 // pred_check
        %p218 = pneg %p144
      $region30: #{block_forward.1} parent=11 // pred_check_branch
        %220 = sbr.rel (%p218) target = $region32
      $region31: #{block_forward.1} parent=11 // pred_region
        _
      $region32: #{block_forward.1} parent=11 // pred_fallthru
        _
      // Predicated region
      $region33: #{block_forward.1} parent=11 // pred_check
        %p221 = pneg %p165
      $region34: #{block_forward.1} parent=11 // pred_check_branch
        %223 = sbr.rel (%p221) target = $region36
      $region35: #{block_forward.1} parent=11 // pred_region
        _
      $region36: #{block_forward.1} parent=11 // pred_fallthru
        _
    $region12: #{block_forward.1} parent=5 // pred_fallthru
      _
    %p224 = scmp.lt.s32.totalorder %s13, 2
    // Predicated region
    $region37: #{block_forward.1} parent=5 // pred_check
      %p225 = pneg %p224
    $region38: #{block_forward.1} parent=5 // pred_check_branch
      %227 = sbr.rel (%p225) target = $region40
    $region39: #{block_forward.1} parent=5 // pred_region
      // Predicated region
      $region41: #{block_forward.1} parent=39 // pred_check
        %p228 = pneg %p33
      $region42: #{block_forward.1} parent=39 // pred_check_branch
        %230 = sbr.rel (%p228) target = $region44
      $region43: #{block_forward.1} parent=39 // pred_region
        %p231 = scmp.lt.s32.totalorder %s13, 1
        %s232 = scalar_select %p231, %s13, 1
        %s233 = smul.addr %s232, 32
        %s234 = smul.addr %s233, 8
        %s235 = scalar_lea.vmem %s0, %s234
      $region44: #{block_forward.1} parent=39 // pred_fallthru
        _
    $region40: #{block_forward.1} parent=5 // pred_fallthru
      _
    %p236 = scmp.le.s32.totalorder 1, %s13
    %p237 = scmp.lt.s32.totalorder %s13, 3
    %p238 = pnand %p236, %p237
    %p239 = pneg %p238
    // Predicated region
    $region45: #{block_forward.1} parent=5 // pred_check
      _
    $region46: #{block_forward.1} parent=5 // pred_check_branch
      %241 = sbr.rel (%p238) target = $region48
    $region47: #{block_forward.1} parent=5 // pred_region
      %s242 = ssub.s32 %s13, 1
      %p243 = scmp.lt.s32.totalorder %s18, 1
      %s244 = scalar_select %p243, %s18, 1
      %s245 = smul.addr %s244, 32
      %s246 = smul.addr %s245, 8
      %s247 = scalar_lea.vmem %s0, %s246
      %p248 = pneg %p39
      %p249 = pneg %p36
      %p250 = pneg %p60
      %p251 = pneg %p57
      %p252 = pneg %p81
      %p253 = pneg %p78
      %p254 = pneg %p102
      %p255 = pneg %p99
      %p256 = pneg %p123
      %p257 = pneg %p120
      %p258 = pneg %p144
      %p259 = pneg %p141
      %p260 = pneg %p165
      %p261 = pneg %p162
      %p262 = pneg %p191
      %p263 = pneg %p188
      %p264 = scmp.lt.s32.totalorder %s18, 1
      %s265 = scalar_select %p264, %s18, 1
      %s266 = smul.addr %s265, 32
      %s267 = smul.addr %s266, 8
      %s268 = scalar_lea.vmem %s7, %s267
      %p269 = scmp.lt.s32.totalorder %s18, 1
      %s270 = scalar_select %p269, %s18, 1
      %s271 = smul.addr %s270, 32
      %s272 = smul.addr %s271, 8
      %s273 = scalar_lea.vmem %s0, %s272
      %p274 = scmp.lt.s32.totalorder %s18, 1
      %s275 = scalar_select %p274, %s18, 1
      %s276 = smul.addr %s275, 32
      %s277 = smul.addr %s276, 8
      %s278 = scalar_lea.vmem %s7, %s277
      %v280 = vld [vmem:[%s273] sm:$0xff]
      %v281 = vld [vmem:[%s273 + $0x8] sm:$0xff]
      %v282 = vld [vmem:[%s273 + $0x10] sm:$0xff]
      %v283 = vld [vmem:[%s273 + $0x18] sm:$0xff]
      %v284 = vld [vmem:[%s273 + $0x20] sm:$0xff]
      %v285 = vld [vmem:[%s273 + $0x28] sm:$0xff]
      %v286 = vld [vmem:[%s273 + $0x30] sm:$0xff]
      %v287 = vld [vmem:[%s273 + $0x38] sm:$0xff]
      %v288 = vld [vmem:[%s273 + $0x40] sm:$0xff]
      %v289 = vld [vmem:[%s273 + $0x48] sm:$0xff]
      %v290 = vld [vmem:[%s273 + $0x50] sm:$0xff]
      %v291 = vld [vmem:[%s273 + $0x58] sm:$0xff]
      %v292 = vld [vmem:[%s273 + $0x60] sm:$0xff]
      %v293 = vld [vmem:[%s273 + $0x68] sm:$0xff]
      %v294 = vld [vmem:[%s273 + $0x70] sm:$0xff]
      %v295 = vld [vmem:[%s273 + $0x78] sm:$0xff]
      %v296 = vld [vmem:[%s273 + $0x80] sm:$0xff]
      %v297 = vld [vmem:[%s273 + $0x88] sm:$0xff]
      %v298 = vld [vmem:[%s273 + $0x90] sm:$0xff]
      %v299 = vld [vmem:[%s273 + $0x98] sm:$0xff]
      %v300 = vld [vmem:[%s273 + $0xa0] sm:$0xff]
      %v301 = vld [vmem:[%s273 + $0xa8] sm:$0xff]
      %v302 = vld [vmem:[%s273 + $0xb0] sm:$0xff]
      %v303 = vld [vmem:[%s273 + $0xb8] sm:$0xff]
      %v304 = vld [vmem:[%s273 + $0xc0] sm:$0xff]
      %v305 = vld [vmem:[%s273 + $0xc8] sm:$0xff]
      %v306 = vld [vmem:[%s273 + $0xd0] sm:$0xff]
      %v307 = vld [vmem:[%s273 + $0xd8] sm:$0xff]
      %v308 = vld [vmem:[%s273 + $0xe0] sm:$0xff]
      %v309 = vld [vmem:[%s273 + $0xe8] sm:$0xff]
      %v310 = vld [vmem:[%s273 + $0xf0] sm:$0xff]
      %v311 = vld [vmem:[%s273 + $0xf8] sm:$0xff]
      %v312 = vpack.c.bf16 %v281, %v280
      %v313 = vpack.c.bf16 %v283, %v282
      %v314 = vpack.c.bf16 %v285, %v284
      %v315 = vpack.c.bf16 %v287, %v286
      %v316 = vpack.c.bf16 %v289, %v288
      %v317 = vpack.c.bf16 %v291, %v290
      %v318 = vpack.c.bf16 %v293, %v292
      %v319 = vpack.c.bf16 %v295, %v294
      %v320 = vpack.c.bf16 %v297, %v296
      %v321 = vpack.c.bf16 %v299, %v298
      %v322 = vpack.c.bf16 %v301, %v300
      %v323 = vpack.c.bf16 %v303, %v302
      %v324 = vpack.c.bf16 %v305, %v304
      %v325 = vpack.c.bf16 %v307, %v306
      %v326 = vpack.c.bf16 %v309, %v308
      %v327 = vpack.c.bf16 %v311, %v310
      %v328 = vld [vmem:[%s1] sm:$0xf]
      %v329 = vld [vmem:[%s1 + $0x4] sm:$0xf]
      %v330 = vld [vmem:[%s2] sm:$0x1]
      %v332 = vperm.slane %v330, 0
      %v336 = vunpack.c.l.b16 %v328
      %v337 = vunpack.c.l.b16 %v329
      %v338 = vpack.c.b16 %v337, %v336
      %vm340 = vcmask 130048
      %v342 = vsel %vm340, %v312, 0
      %v345 = vsel %vm340, %v313, 0
      %v348 = vsel %vm340, %v314, 0
      %v351 = vsel %vm340, %v315, 0
      %v354 = vsel %vm340, %v316, 0
      %v357 = vsel %vm340, %v317, 0
      %v360 = vsel %vm340, %v318, 0
      %v363 = vsel %vm340, %v319, 0
      %v366 = vsel %vm340, %v320, 0
      %v369 = vsel %vm340, %v321, 0
      %v372 = vsel %vm340, %v322, 0
      %v375 = vsel %vm340, %v323, 0
      %v378 = vsel %vm340, %v324, 0
      %v381 = vsel %vm340, %v325, 0
      %v384 = vsel %vm340, %v326, 0
      %v387 = vsel %vm340, %v327, 0
      %389 = vmatpush.bf16.msra.mxu0 0
      %390 = vmatpush.bf16.msra.mxu0 0
      %391 = vmatpush.bf16.msra.mxu0 0
      %392 = vmatpush.bf16.msra.mxu0 0
      %393 = vmatpush.bf16.msra.mxu0 0
      %394 = vmatpush.bf16.msra.mxu0 0
      %395 = vmatpush.bf16.msra.mxu0 0
      %396 = vmatpush.bf16.msra.mxu0 %v338
      %397 = vmatmul.bf16.gmra.mxu0 %v342
      %v398 = vpop.f32.mrf.mxu0
      %v399 = vadd.f32 %v332, %v398
      %v400 = vpop.f32.mrf.mxu0
      %v401 = vadd.f32 %v332, %v400
      %402 = vmatmul.bf16.gmra.mxu0 %v345
      %v403 = vpop.f32.mrf.mxu0
      %v404 = vadd.f32 %v332, %v403
      %v405 = vpop.f32.mrf.mxu0
      %v406 = vadd.f32 %v332, %v405
      %407 = vmatmul.bf16.gmra.mxu0 %v348
      %v408 = vpop.f32.mrf.mxu0
      %v409 = vadd.f32 %v332, %v408
      %v410 = vpop.f32.mrf.mxu0
      %v411 = vadd.f32 %v332, %v410
      %412 = vmatmul.bf16.gmra.mxu0 %v351
      %v413 = vpop.f32.mrf.mxu0
      %v414 = vadd.f32 %v332, %v413
      %v415 = vpop.f32.mrf.mxu0
      %v416 = vadd.f32 %v332, %v415
      %417 = vmatmul.bf16.gmra.mxu0 %v354
      %v418 = vpop.f32.mrf.mxu0
      %v419 = vadd.f32 %v332, %v418
      %v420 = vpop.f32.mrf.mxu0
      %v421 = vadd.f32 %v332, %v420
      %422 = vmatmul.bf16.gmra.mxu0 %v357
      %v423 = vpop.f32.mrf.mxu0
      %v424 = vadd.f32 %v332, %v423
      %v425 = vpop.f32.mrf.mxu0
      %v426 = vadd.f32 %v332, %v425
      %427 = vmatmul.bf16.gmra.mxu0 %v360
      %v428 = vpop.f32.mrf.mxu0
      %v429 = vadd.f32 %v332, %v428
      %v430 = vpop.f32.mrf.mxu0
      %v431 = vadd.f32 %v332, %v430
      %432 = vmatmul.bf16.gmra.mxu0 %v363
      %v433 = vpop.f32.mrf.mxu0
      %v434 = vadd.f32 %v332, %v433
      %v435 = vpop.f32.mrf.mxu0
      %v436 = vadd.f32 %v332, %v435
      %437 = vmatmul.bf16.gmra.mxu0 %v366
      %v438 = vpop.f32.mrf.mxu0
      %v439 = vadd.f32 %v332, %v438
      %v440 = vpop.f32.mrf.mxu0
      %v441 = vadd.f32 %v332, %v440
      %442 = vmatmul.bf16.gmra.mxu0 %v369
      %v443 = vpop.f32.mrf.mxu0
      %v444 = vadd.f32 %v332, %v443
      %v445 = vpop.f32.mrf.mxu0
      %v446 = vadd.f32 %v332, %v445
      %447 = vmatmul.bf16.gmra.mxu0 %v372
      %v448 = vpop.f32.mrf.mxu0
      %v449 = vadd.f32 %v332, %v448
      %v450 = vpop.f32.mrf.mxu0
      %v451 = vadd.f32 %v332, %v450
      %452 = vmatmul.bf16.gmra.mxu0 %v375
      %v453 = vpop.f32.mrf.mxu0
      %v454 = vadd.f32 %v332, %v453
      %v455 = vpop.f32.mrf.mxu0
      %v456 = vadd.f32 %v332, %v455
      %457 = vmatmul.bf16.gmra.mxu0 %v378
      %v458 = vpop.f32.mrf.mxu0
      %v459 = vadd.f32 %v332, %v458
      %v460 = vpop.f32.mrf.mxu0
      %v461 = vadd.f32 %v332, %v460
      %462 = vmatmul.bf16.gmra.mxu0 %v381
      %v463 = vpop.f32.mrf.mxu0
      %v464 = vadd.f32 %v332, %v463
      %v465 = vpop.f32.mrf.mxu0
      %v466 = vadd.f32 %v332, %v465
      %467 = vmatmul.bf16.gmra.mxu0 %v384
      %v468 = vpop.f32.mrf.mxu0
      %v469 = vadd.f32 %v332, %v468
      %v470 = vpop.f32.mrf.mxu0
      %v471 = vadd.f32 %v332, %v470
      %472 = vmatmul.bf16.gmra.mxu0 %v387
      %v473 = vpop.f32.mrf.mxu0
      %v474 = vadd.f32 %v332, %v473
      %v475 = vpop.f32.mrf.mxu0
      %v476 = vadd.f32 %v332, %v475
      %477 = vdwg.mxu0
      %v478 = vmax.f32 %v399, 0.0
      %v479 = vmax.f32 %v401, 0.0
      %v480 = vmax.f32 %v404, 0.0
      %v481 = vmax.f32 %v406, 0.0
      %v482 = vmax.f32 %v409, 0.0
      %v483 = vmax.f32 %v411, 0.0
      %v484 = vmax.f32 %v414, 0.0
      %v485 = vmax.f32 %v416, 0.0
      %v486 = vmax.f32 %v419, 0.0
      %v487 = vmax.f32 %v421, 0.0
      %v488 = vmax.f32 %v424, 0.0
      %v489 = vmax.f32 %v426, 0.0
      %v490 = vmax.f32 %v429, 0.0
      %v491 = vmax.f32 %v431, 0.0
      %v492 = vmax.f32 %v434, 0.0
      %v493 = vmax.f32 %v436, 0.0
      %v494 = vmax.f32 %v439, 0.0
      %v495 = vmax.f32 %v441, 0.0
      %v496 = vmax.f32 %v444, 0.0
      %v497 = vmax.f32 %v446, 0.0
      %v498 = vmax.f32 %v449, 0.0
      %v499 = vmax.f32 %v451, 0.0
      %v500 = vmax.f32 %v454, 0.0
      %v501 = vmax.f32 %v456, 0.0
      %v502 = vmax.f32 %v459, 0.0
      %v503 = vmax.f32 %v461, 0.0
      %v504 = vmax.f32 %v464, 0.0
      %v505 = vmax.f32 %v466, 0.0
      %v506 = vmax.f32 %v469, 0.0
      %v507 = vmax.f32 %v471, 0.0
      %v508 = vmax.f32 %v474, 0.0
      %v509 = vmax.f32 %v476, 0.0
      %vm510 = vcmask 31744
      %511 = vst.msk [vmem:[#allocation2] sm:$0xff] %vm510, 0.0
      %512 = vst.msk [vmem:[#allocation2 + $0x8] sm:$0xff] %vm510, 0.0
      %vm513 = vcmask 25600
      %514 = vst.msk [vmem:[#allocation2 + $0x10] sm:$0x3] %vm513, 0.0
      %515 = vst.msk [vmem:[#allocation2 + $0x18] sm:$0xff] %vm510, 0.0
      %516 = vst.msk [vmem:[#allocation2 + $0x20] sm:$0xff] %vm510, 0.0
      %517 = vst.msk [vmem:[#allocation2 + $0x28] sm:$0x3] %vm513, 0.0
      %518 = vst.msk [vmem:[#allocation2 + $0x30] sm:$0xff] %vm510, 0.0
      %519 = vst.msk [vmem:[#allocation2 + $0x38] sm:$0xff] %vm510, 0.0
      %520 = vst.msk [vmem:[#allocation2 + $0x40] sm:$0x3] %vm513, 0.0
      %521 = vst.msk [vmem:[#allocation2 + $0x48] sm:$0xff] %vm510, 0.0
      %522 = vst.msk [vmem:[#allocation2 + $0x50] sm:$0xff] %vm510, 0.0
      %523 = vst.msk [vmem:[#allocation2 + $0x58] sm:$0x3] %vm513, 0.0
      %524 = vst.msk [vmem:[#allocation2 + $0x60] sm:$0xff] %vm510, 0.0
      %525 = vst.msk [vmem:[#allocation2 + $0x68] sm:$0xff] %vm510, 0.0
      %526 = vst.msk [vmem:[#allocation2 + $0x70] sm:$0x3] %vm513, 0.0
      %527 = vst.msk [vmem:[#allocation2 + $0x78] sm:$0xff] %vm510, 0.0
      %528 = vst.msk [vmem:[#allocation2 + $0x80] sm:$0xff] %vm510, 0.0
      %529 = vst.msk [vmem:[#allocation2 + $0x88] sm:$0x3] %vm513, 0.0
      %530 = vst.msk [vmem:[#allocation2 + $0x90] sm:$0xff] %vm510, 0.0
      %531 = vst.msk [vmem:[#allocation2 + $0x98] sm:$0xff] %vm510, 0.0
      %532 = vst.msk [vmem:[#allocation2 + $0xa0] sm:$0x3] %vm513, 0.0
      %533 = vst.msk [vmem:[#allocation2 + $0xa8] sm:$0xff] %vm510, 0.0
      %534 = vst.msk [vmem:[#allocation2 + $0xb0] sm:$0xff] %vm510, 0.0
      %535 = vst.msk [vmem:[#allocation2 + $0xb8] sm:$0x3] %vm513, 0.0
      %536 = vst.msk [vmem:[#allocation2 + $0xc0] sm:$0xff] %vm510, 0.0
      %537 = vst.msk [vmem:[#allocation2 + $0xc8] sm:$0xff] %vm510, 0.0
      %538 = vst.msk [vmem:[#allocation2 + $0xd0] sm:$0x3] %vm513, 0.0
      %539 = vst.msk [vmem:[#allocation2 + $0xd8] sm:$0xff] %vm510, 0.0
      %540 = vst.msk [vmem:[#allocation2 + $0xe0] sm:$0xff] %vm510, 0.0
      %541 = vst.msk [vmem:[#allocation2 + $0xe8] sm:$0x3] %vm513, 0.0
      %542 = vst.msk [vmem:[#allocation2 + $0xf0] sm:$0xff] %vm510, 0.0
      %543 = vst.msk [vmem:[#allocation2 + $0xf8] sm:$0xff] %vm510, 0.0
      %544 = vst.msk [vmem:[#allocation2 + $0x100] sm:$0x3] %vm513, 0.0
      %545 = vst.msk [vmem:[#allocation2 + $0x108] sm:$0xff] %vm510, 0.0
      %546 = vst.msk [vmem:[#allocation2 + $0x110] sm:$0xff] %vm510, 0.0
      %547 = vst.msk [vmem:[#allocation2 + $0x118] sm:$0x3] %vm513, 0.0
      %548 = vst.msk [vmem:[#allocation2 + $0x120] sm:$0xff] %vm510, 0.0
      %549 = vst.msk [vmem:[#allocation2 + $0x128] sm:$0xff] %vm510, 0.0
      %550 = vst.msk [vmem:[#allocation2 + $0x130] sm:$0x3] %vm513, 0.0
      %551 = vst.msk [vmem:[#allocation2 + $0x138] sm:$0xff] %vm510, 0.0
      %552 = vst.msk [vmem:[#allocation2 + $0x140] sm:$0xff] %vm510, 0.0
      %553 = vst.msk [vmem:[#allocation2 + $0x148] sm:$0x3] %vm513, 0.0
      %554 = vst.msk [vmem:[#allocation2 + $0x150] sm:$0xff] %vm510, 0.0
      %555 = vst.msk [vmem:[#allocation2 + $0x158] sm:$0xff] %vm510, 0.0
      %556 = vst.msk [vmem:[#allocation2 + $0x160] sm:$0x3] %vm513, 0.0
      %557 = vst.msk [vmem:[#allocation2 + $0x168] sm:$0xff] %vm510, 0.0
      %558 = vst.msk [vmem:[#allocation2 + $0x170] sm:$0xff] %vm510, 0.0
      %559 = vst.msk [vmem:[#allocation2 + $0x178] sm:$0x3] %vm513, 0.0
      %560 = vst.msk [vmem:[#allocation2 + $0x180] sm:$0xff] %vm510, 0.0
      %561 = vst.msk [vmem:[#allocation2 + $0x188] sm:$0xff] %vm510, 0.0
      %562 = vst.msk [vmem:[#allocation2 + $0x190] sm:$0x3] %vm513, 0.0
      %563 = vst.msk [vmem:[#allocation2 + $0x198] sm:$0xff] %vm510, 0.0
      %564 = vst.msk [vmem:[#allocation2 + $0x1a0] sm:$0xff] %vm510, 0.0
      %565 = vst.msk [vmem:[#allocation2 + $0x1a8] sm:$0x3] %vm513, 0.0
      %s566 = scalar_lea.vmem [#allocation2], 24
      %567 = vst.msk [vmem:[%s566 + $0x1] sm:$0xff] %vm510, %v478
      %568 = vst.msk [vmem:[%s566 + $0x9] sm:$0xff] %vm510, %v479
      %569 = vst.msk [vmem:[%s566 + $0x19] sm:$0xff] %vm510, %v480
      %570 = vst.msk [vmem:[%s566 + $0x21] sm:$0xff] %vm510, %v481
      %571 = vst.msk [vmem:[%s566 + $0x31] sm:$0xff] %vm510, %v482
      %572 = vst.msk [vmem:[%s566 + $0x39] sm:$0xff] %vm510, %v483
      %573 = vst.msk [vmem:[%s566 + $0x49] sm:$0xff] %vm510, %v484
      %574 = vst.msk [vmem:[%s566 + $0x51] sm:$0xff] %vm510, %v485
      %575 = vst.msk [vmem:[%s566 + $0x61] sm:$0xff] %vm510, %v486
      %576 = vst.msk [vmem:[%s566 + $0x69] sm:$0xff] %vm510, %v487
      %577 = vst.msk [vmem:[%s566 + $0x79] sm:$0xff] %vm510, %v488
      %578 = vst.msk [vmem:[%s566 + $0x81] sm:$0xff] %vm510, %v489
      %579 = vst.msk [vmem:[%s566 + $0x91] sm:$0xff] %vm510, %v490
      %580 = vst.msk [vmem:[%s566 + $0x99] sm:$0xff] %vm510, %v491
      %581 = vst.msk [vmem:[%s566 + $0xa9] sm:$0xff] %vm510, %v492
      %582 = vst.msk [vmem:[%s566 + $0xb1] sm:$0xff] %vm510, %v493
      %583 = vst.msk [vmem:[%s566 + $0xc1] sm:$0xff] %vm510, %v494
      %584 = vst.msk [vmem:[%s566 + $0xc9] sm:$0xff] %vm510, %v495
      %585 = vst.msk [vmem:[%s566 + $0xd9] sm:$0xff] %vm510, %v496
      %586 = vst.msk [vmem:[%s566 + $0xe1] sm:$0xff] %vm510, %v497
      %587 = vst.msk [vmem:[%s566 + $0xf1] sm:$0xff] %vm510, %v498
      %588 = vst.msk [vmem:[%s566 + $0xf9] sm:$0xff] %vm510, %v499
      %589 = vst.msk [vmem:[%s566 + $0x109] sm:$0xff] %vm510, %v500
      %590 = vst.msk [vmem:[%s566 + $0x111] sm:$0xff] %vm510, %v501
      %591 = vst.msk [vmem:[%s566 + $0x121] sm:$0xff] %vm510, %v502
      %592 = vst.msk [vmem:[%s566 + $0x129] sm:$0xff] %vm510, %v503
      %593 = vst.msk [vmem:[%s566 + $0x139] sm:$0xff] %vm510, %v504
      %594 = vst.msk [vmem:[%s566 + $0x141] sm:$0xff] %vm510, %v505
      %595 = vst.msk [vmem:[%s566 + $0x151] sm:$0xff] %vm510, %v506
      %596 = vst.msk [vmem:[%s566 + $0x159] sm:$0xff] %vm510, %v507
      %597 = vst.msk [vmem:[%s566 + $0x169] sm:$0xff] %vm510, %v508
      %598 = vst.msk [vmem:[%s566 + $0x171] sm:$0xff] %vm510, %v509
      %v599 = vld [vmem:[#allocation2] sm:$0xff]
      %v600 = vld [vmem:[#allocation2 + $0x8] sm:$0xff]
      %v601 = vld [vmem:[#allocation2 + $0x18] sm:$0xff]
      %v602 = vld [vmem:[#allocation2 + $0x20] sm:$0xff]
      %v603 = vld [vmem:[#allocation2 + $0x30] sm:$0xff]
      %v604 = vld [vmem:[#allocation2 + $0x38] sm:$0xff]
      %v605 = vld [vmem:[#allocation2 + $0x48] sm:$0xff]
      %v606 = vld [vmem:[#allocation2 + $0x50] sm:$0xff]
      %v607 = vld [vmem:[#allocation2 + $0x60] sm:$0xff]
      %v608 = vld [vmem:[#allocation2 + $0x68] sm:$0xff]
      %v609 = vld [vmem:[#allocation2 + $0x78] sm:$0xff]
      %v610 = vld [vmem:[#allocation2 + $0x80] sm:$0xff]
      %v611 = vld [vmem:[#allocation2 + $0x90] sm:$0xff]
      %v612 = vld [vmem:[#allocation2 + $0x98] sm:$0xff]
      %v613 = vld [vmem:[#allocation2 + $0xa8] sm:$0xff]
      %v614 = vld [vmem:[#allocation2 + $0xb0] sm:$0xff]
      %v615 = vld [vmem:[#allocation2 + $0xc0] sm:$0xff]
      %v616 = vld [vmem:[#allocation2 + $0xc8] sm:$0xff]
      %v617 = vld [vmem:[#allocation2 + $0xd8] sm:$0xff]
      %v618 = vld [vmem:[#allocation2 + $0xe0] sm:$0xff]
      %v619 = vld [vmem:[#allocation2 + $0xf0] sm:$0xff]
      %v620 = vld [vmem:[#allocation2 + $0xf8] sm:$0xff]
      %v621 = vld [vmem:[#allocation2 + $0x108] sm:$0xff]
      %v622 = vld [vmem:[#allocation2 + $0x110] sm:$0xff]
      %v623 = vld [vmem:[#allocation2 + $0x120] sm:$0xff]
      %v624 = vld [vmem:[#allocation2 + $0x128] sm:$0xff]
      %v625 = vld [vmem:[#allocation2 + $0x138] sm:$0xff]
      %v626 = vld [vmem:[#allocation2 + $0x140] sm:$0xff]
      %v627 = vld [vmem:[#allocation2 + $0x150] sm:$0xff]
      %v628 = vld [vmem:[#allocation2 + $0x158] sm:$0xff]
      %v629 = vld [vmem:[#allocation2 + $0x168] sm:$0xff]
      %v630 = vld [vmem:[#allocation2 + $0x170] sm:$0xff]
      %v631 = vld [vmem:[#allocation2 + $0x1] sm:$0xff]
      %v632 = vld [vmem:[#allocation2 + $0x9] sm:$0xff]
      %v633 = vld [vmem:[#allocation2 + $0x19] sm:$0xff]
      %v634 = vld [vmem:[#allocation2 + $0x21] sm:$0xff]
      %v635 = vld [vmem:[#allocation2 + $0x31] sm:$0xff]
      %v636 = vld [vmem:[#allocation2 + $0x39] sm:$0xff]
      %v637 = vld [vmem:[#allocation2 + $0x49] sm:$0xff]
      %v638 = vld [vmem:[#allocation2 + $0x51] sm:$0xff]
      %v639 = vld [vmem:[#allocation2 + $0x61] sm:$0xff]
      %v640 = vld [vmem:[#allocation2 + $0x69] sm:$0xff]
      %v641 = vld [vmem:[#allocation2 + $0x79] sm:$0xff]
      %v642 = vld [vmem:[#allocation2 + $0x81] sm:$0xff]
      %v643 = vld [vmem:[#allocation2 + $0x91] sm:$0xff]
      %v644 = vld [vmem:[#allocation2 + $0x99] sm:$0xff]
      %v645 = vld [vmem:[#allocation2 + $0xa9] sm:$0xff]
      %v646 = vld [vmem:[#allocation2 + $0xb1] sm:$0xff]
      %v647 = vld [vmem:[#allocation2 + $0xc1] sm:$0xff]
      %v648 = vld [vmem:[#allocation2 + $0xc9] sm:$0xff]
      %v649 = vld [vmem:[#allocation2 + $0xd9] sm:$0xff]
      %v650 = vld [vmem:[#allocation2 + $0xe1] sm:$0xff]
      %v651 = vld [vmem:[#allocation2 + $0xf1] sm:$0xff]
      %v652 = vld [vmem:[#allocation2 + $0xf9] sm:$0xff]
      %v653 = vld [vmem:[#allocation2 + $0x109] sm:$0xff]
      %v654 = vld [vmem:[#allocation2 + $0x111] sm:$0xff]
      %v655 = vld [vmem:[#allocation2 + $0x121] sm:$0xff]
      %v656 = vld [vmem:[#allocation2 + $0x129] sm:$0xff]
      %v657 = vld [vmem:[#allocation2 + $0x139] sm:$0xff]
      %v658 = vld [vmem:[#allocation2 + $0x141] sm:$0xff]
      %v659 = vld [vmem:[#allocation2 + $0x151] sm:$0xff]
      %v660 = vld [vmem:[#allocation2 + $0x159] sm:$0xff]
      %v661 = vld [vmem:[#allocation2 + $0x169] sm:$0xff]
      %v662 = vld [vmem:[#allocation2 + $0x171] sm:$0xff]
      %v663 = vld [vmem:[#allocation2 + $0x2] sm:$0xff]
      %v664 = vld [vmem:[#allocation2 + $0xa] sm:$0xff]
      %v665 = vld [vmem:[#allocation2 + $0x1a] sm:$0xff]
      %v666 = vld [vmem:[#allocation2 + $0x22] sm:$0xff]
      %v667 = vld [vmem:[#allocation2 + $0x32] sm:$0xff]
      %v668 = vld [vmem:[#allocation2 + $0x3a] sm:$0xff]
      %v669 = vld [vmem:[#allocation2 + $0x4a] sm:$0xff]
      %v670 = vld [vmem:[#allocation2 + $0x52] sm:$0xff]
      %v671 = vld [vmem:[#allocation2 + $0x62] sm:$0xff]
      %v672 = vld [vmem:[#allocation2 + $0x6a] sm:$0xff]
      %v673 = vld [vmem:[#allocation2 + $0x7a] sm:$0xff]
      %v674 = vld [vmem:[#allocation2 + $0x82] sm:$0xff]
      %v675 = vld [vmem:[#allocation2 + $0x92] sm:$0xff]
      %v676 = vld [vmem:[#allocation2 + $0x9a] sm:$0xff]
      %v677 = vld [vmem:[#allocation2 + $0xaa] sm:$0xff]
      %v678 = vld [vmem:[#allocation2 + $0xb2] sm:$0xff]
      %v679 = vld [vmem:[#allocation2 + $0xc2] sm:$0xff]
      %v680 = vld [vmem:[#allocation2 + $0xca] sm:$0xff]
      %v681 = vld [vmem:[#allocation2 + $0xda] sm:$0xff]
      %v682 = vld [vmem:[#allocation2 + $0xe2] sm:$0xff]
      %v683 = vld [vmem:[#allocation2 + $0xf2] sm:$0xff]
      %v684 = vld [vmem:[#allocation2 + $0xfa] sm:$0xff]
      %v685 = vld [vmem:[#allocation2 + $0x10a] sm:$0xff]
      %v686 = vld [vmem:[#allocation2 + $0x112] sm:$0xff]
      %v687 = vld [vmem:[#allocation2 + $0x122] sm:$0xff]
      %v688 = vld [vmem:[#allocation2 + $0x12a] sm:$0xff]
      %v689 = vld [vmem:[#allocation2 + $0x13a] sm:$0xff]
      %v690 = vld [vmem:[#allocation2 + $0x142] sm:$0xff]
      %v691 = vld [vmem:[#allocation2 + $0x152] sm:$0xff]
      %v692 = vld [vmem:[#allocation2 + $0x15a] sm:$0xff]
      %v693 = vld [vmem:[#allocation2 + $0x16a] sm:$0xff]
      %v694 = vld [vmem:[#allocation2 + $0x172] sm:$0xff]
      %727 = vrot.lane.b32.xlu0 %v631, 4
      %v728 = vpop.permute.xlu0 %727
      %729 = vrot.lane.b32.xlu0 %v632, 4
      %v730 = vpop.permute.xlu0 %729
      %731 = vrot.lane.b32.xlu0 %v633, 4
      %v732 = vpop.permute.xlu0 %731
      %733 = vrot.lane.b32.xlu0 %v634, 4
      %v734 = vpop.permute.xlu0 %733
      %735 = vrot.lane.b32.xlu0 %v635, 4
      %v736 = vpop.permute.xlu0 %735
      %737 = vrot.lane.b32.xlu0 %v636, 4
      %v738 = vpop.permute.xlu0 %737
      %739 = vrot.lane.b32.xlu0 %v637, 4
      %v740 = vpop.permute.xlu0 %739
      %741 = vrot.lane.b32.xlu0 %v638, 4
      %v742 = vpop.permute.xlu0 %741
      %743 = vrot.lane.b32.xlu0 %v639, 4
      %v744 = vpop.permute.xlu0 %743
      %745 = vrot.lane.b32.xlu0 %v640, 4
      %v746 = vpop.permute.xlu0 %745
      %747 = vrot.lane.b32.xlu0 %v641, 4
      %v748 = vpop.permute.xlu0 %747
      %749 = vrot.lane.b32.xlu0 %v642, 4
      %v750 = vpop.permute.xlu0 %749
      %751 = vrot.lane.b32.xlu0 %v643, 4
      %v752 = vpop.permute.xlu0 %751
      %753 = vrot.lane.b32.xlu0 %v644, 4
      %v754 = vpop.permute.xlu0 %753
      %755 = vrot.lane.b32.xlu0 %v645, 4
      %v756 = vpop.permute.xlu0 %755
      %757 = vrot.lane.b32.xlu0 %v646, 4
      %v758 = vpop.permute.xlu0 %757
      %759 = vrot.lane.b32.xlu0 %v647, 4
      %v760 = vpop.permute.xlu0 %759
      %761 = vrot.lane.b32.xlu0 %v648, 4
      %v762 = vpop.permute.xlu0 %761
      %763 = vrot.lane.b32.xlu0 %v649, 4
      %v764 = vpop.permute.xlu0 %763
      %765 = vrot.lane.b32.xlu0 %v650, 4
      %v766 = vpop.permute.xlu0 %765
      %767 = vrot.lane.b32.xlu0 %v651, 4
      %v768 = vpop.permute.xlu0 %767
      %769 = vrot.lane.b32.xlu0 %v652, 4
      %v770 = vpop.permute.xlu0 %769
      %771 = vrot.lane.b32.xlu0 %v653, 4
      %v772 = vpop.permute.xlu0 %771
      %773 = vrot.lane.b32.xlu0 %v654, 4
      %v774 = vpop.permute.xlu0 %773
      %775 = vrot.lane.b32.xlu0 %v655, 4
      %v776 = vpop.permute.xlu0 %775
      %777 = vrot.lane.b32.xlu0 %v656, 4
      %v778 = vpop.permute.xlu0 %777
      %779 = vrot.lane.b32.xlu0 %v657, 4
      %v780 = vpop.permute.xlu0 %779
      %781 = vrot.lane.b32.xlu0 %v658, 4
      %v782 = vpop.permute.xlu0 %781
      %783 = vrot.lane.b32.xlu0 %v659, 4
      %v784 = vpop.permute.xlu0 %783
      %785 = vrot.lane.b32.xlu0 %v660, 4
      %v786 = vpop.permute.xlu0 %785
      %787 = vrot.lane.b32.xlu0 %v661, 4
      %v788 = vpop.permute.xlu0 %787
      %789 = vrot.lane.b32.xlu0 %v662, 4
      %v790 = vpop.permute.xlu0 %789
      %855 = vrot.lane.b32.xlu0 %v663, 8
      %v856 = vpop.permute.xlu0 %855
      %857 = vrot.lane.b32.xlu0 %v664, 8
      %v858 = vpop.permute.xlu0 %857
      %859 = vrot.lane.b32.xlu0 %v665, 8
      %v860 = vpop.permute.xlu0 %859
      %861 = vrot.lane.b32.xlu0 %v666, 8
      %v862 = vpop.permute.xlu0 %861
      %863 = vrot.lane.b32.xlu0 %v667, 8
      %v864 = vpop.permute.xlu0 %863
      %865 = vrot.lane.b32.xlu0 %v668, 8
      %v866 = vpop.permute.xlu0 %865
      %867 = vrot.lane.b32.xlu0 %v669, 8
      %v868 = vpop.permute.xlu0 %867
      %869 = vrot.lane.b32.xlu0 %v670, 8
      %v870 = vpop.permute.xlu0 %869
      %871 = vrot.lane.b32.xlu0 %v671, 8
      %v872 = vpop.permute.xlu0 %871
      %873 = vrot.lane.b32.xlu0 %v672, 8
      %v874 = vpop.permute.xlu0 %873
      %875 = vrot.lane.b32.xlu0 %v673, 8
      %v876 = vpop.permute.xlu0 %875
      %877 = vrot.lane.b32.xlu0 %v674, 8
      %v878 = vpop.permute.xlu0 %877
      %879 = vrot.lane.b32.xlu0 %v675, 8
      %v880 = vpop.permute.xlu0 %879
      %881 = vrot.lane.b32.xlu0 %v676, 8
      %v882 = vpop.permute.xlu0 %881
      %883 = vrot.lane.b32.xlu0 %v677, 8
      %v884 = vpop.permute.xlu0 %883
      %885 = vrot.lane.b32.xlu0 %v678, 8
      %v886 = vpop.permute.xlu0 %885
      %887 = vrot.lane.b32.xlu0 %v679, 8
      %v888 = vpop.permute.xlu0 %887
      %889 = vrot.lane.b32.xlu0 %v680, 8
      %v890 = vpop.permute.xlu0 %889
      %891 = vrot.lane.b32.xlu0 %v681, 8
      %v892 = vpop.permute.xlu0 %891
      %893 = vrot.lane.b32.xlu0 %v682, 8
      %v894 = vpop.permute.xlu0 %893
      %895 = vrot.lane.b32.xlu0 %v683, 8
      %v896 = vpop.permute.xlu0 %895
      %897 = vrot.lane.b32.xlu0 %v684, 8
      %v898 = vpop.permute.xlu0 %897
      %899 = vrot.lane.b32.xlu0 %v685, 8
      %v900 = vpop.permute.xlu0 %899
      %901 = vrot.lane.b32.xlu0 %v686, 8
      %v902 = vpop.permute.xlu0 %901
      %903 = vrot.lane.b32.xlu0 %v687, 8
      %v904 = vpop.permute.xlu0 %903
      %905 = vrot.lane.b32.xlu0 %v688, 8
      %v906 = vpop.permute.xlu0 %905
      %907 = vrot.lane.b32.xlu0 %v689, 8
      %v908 = vpop.permute.xlu0 %907
      %909 = vrot.lane.b32.xlu0 %v690, 8
      %v910 = vpop.permute.xlu0 %909
      %911 = vrot.lane.b32.xlu0 %v691, 8
      %v912 = vpop.permute.xlu0 %911
      %913 = vrot.lane.b32.xlu0 %v692, 8
      %v914 = vpop.permute.xlu0 %913
      %915 = vrot.lane.b32.xlu0 %v693, 8
      %v916 = vpop.permute.xlu0 %915
      %917 = vrot.lane.b32.xlu0 %v694, 8
      %v918 = vpop.permute.xlu0 %917
      %v951 = vsel %vm510, %v599, %v728
      %v952 = vsel %vm510, %v600, %v730
      %v953 = vsel %vm510, %v601, %v732
      %v954 = vsel %vm510, %v602, %v734
      %v955 = vsel %vm510, %v603, %v736
      %v956 = vsel %vm510, %v604, %v738
      %v957 = vsel %vm510, %v605, %v740
      %v958 = vsel %vm510, %v606, %v742
      %v959 = vsel %vm510, %v607, %v744
      %v960 = vsel %vm510, %v608, %v746
      %v961 = vsel %vm510, %v609, %v748
      %v962 = vsel %vm510, %v610, %v750
      %v963 = vsel %vm510, %v611, %v752
      %v964 = vsel %vm510, %v612, %v754
      %v965 = vsel %vm510, %v613, %v756
      %v966 = vsel %vm510, %v614, %v758
      %v967 = vsel %vm510, %v615, %v760
      %v968 = vsel %vm510, %v616, %v762
      %v969 = vsel %vm510, %v617, %v764
      %v970 = vsel %vm510, %v618, %v766
      %v971 = vsel %vm510, %v619, %v768
      %v972 = vsel %vm510, %v620, %v770
      %v973 = vsel %vm510, %v621, %v772
      %v974 = vsel %vm510, %v622, %v774
      %v975 = vsel %vm510, %v623, %v776
      %v976 = vsel %vm510, %v624, %v778
      %v977 = vsel %vm510, %v625, %v780
      %v978 = vsel %vm510, %v626, %v782
      %v979 = vsel %vm510, %v627, %v784
      %v980 = vsel %vm510, %v628, %v786
      %v981 = vsel %vm510, %v629, %v788
      %v982 = vsel %vm510, %v630, %v790
      %vm983 = vcmask 64512
      %v984 = vsel %vm983, %v951, %v856
      %v985 = vsel %vm983, %v952, %v858
      %v986 = vsel %vm983, %v953, %v860
      %v987 = vsel %vm983, %v954, %v862
      %v988 = vsel %vm983, %v955, %v864
      %v989 = vsel %vm983, %v956, %v866
      %v990 = vsel %vm983, %v957, %v868
      %v991 = vsel %vm983, %v958, %v870
      %v992 = vsel %vm983, %v959, %v872
      %v993 = vsel %vm983, %v960, %v874
      %v994 = vsel %vm983, %v961, %v876
      %v995 = vsel %vm983, %v962, %v878
      %v996 = vsel %vm983, %v963, %v880
      %v997 = vsel %vm983, %v964, %v882
      %v998 = vsel %vm983, %v965, %v884
      %v999 = vsel %vm983, %v966, %v886
      %v1000 = vsel %vm983, %v967, %v888
      %v1001 = vsel %vm983, %v968, %v890
      %v1002 = vsel %vm983, %v969, %v892
      %v1003 = vsel %vm983, %v970, %v894
      %v1004 = vsel %vm983, %v971, %v896
      %v1005 = vsel %vm983, %v972, %v898
      %v1006 = vsel %vm983, %v973, %v900
      %v1007 = vsel %vm983, %v974, %v902
      %v1008 = vsel %vm983, %v975, %v904
      %v1009 = vsel %vm983, %v976, %v906
      %v1010 = vsel %vm983, %v977, %v908
      %v1011 = vsel %vm983, %v978, %v910
      %v1012 = vsel %vm983, %v979, %v912
      %v1013 = vsel %vm983, %v980, %v914
      %v1014 = vsel %vm983, %v981, %v916
      %v1015 = vsel %vm983, %v982, %v918
      %v1016 = vpack.c.bf16 %v985, %v984
      %v1017 = vpack.c.bf16 %v987, %v986
      %v1018 = vpack.c.bf16 %v989, %v988
      %v1019 = vpack.c.bf16 %v991, %v990
      %v1020 = vpack.c.bf16 %v993, %v992
      %v1021 = vpack.c.bf16 %v995, %v994
      %v1022 = vpack.c.bf16 %v997, %v996
      %v1023 = vpack.c.bf16 %v999, %v998
      %v1024 = vpack.c.bf16 %v1001, %v1000
      %v1025 = vpack.c.bf16 %v1003, %v1002
      %v1026 = vpack.c.bf16 %v1005, %v1004
      %v1027 = vpack.c.bf16 %v1007, %v1006
      %v1028 = vpack.c.bf16 %v1009, %v1008
      %v1029 = vpack.c.bf16 %v1011, %v1010
      %v1030 = vpack.c.bf16 %v1013, %v1012
      %v1031 = vpack.c.bf16 %v1015, %v1014
      %v1032 = vld [vmem:[%s3] sm:$0xf]
      %v1033 = vld [vmem:[%s3 + $0x4] sm:$0x3]
      %v1034 = vld [vmem:[%s566] sm:$0xff]
      %v1035 = vld [vmem:[%s566 + $0x8] sm:$0xff]
      %v1036 = vld [vmem:[%s566 + $0x18] sm:$0xff]
      %v1037 = vld [vmem:[%s566 + $0x20] sm:$0xff]
      %v1038 = vld [vmem:[%s566 + $0x30] sm:$0xff]
      %v1039 = vld [vmem:[%s566 + $0x38] sm:$0xff]
      %v1040 = vld [vmem:[%s566 + $0x48] sm:$0xff]
      %v1041 = vld [vmem:[%s566 + $0x50] sm:$0xff]
      %v1042 = vld [vmem:[%s566 + $0x60] sm:$0xff]
      %v1043 = vld [vmem:[%s566 + $0x68] sm:$0xff]
      %v1044 = vld [vmem:[%s566 + $0x78] sm:$0xff]
      %v1045 = vld [vmem:[%s566 + $0x80] sm:$0xff]
      %v1046 = vld [vmem:[%s566 + $0x90] sm:$0xff]
      %v1047 = vld [vmem:[%s566 + $0x98] sm:$0xff]
      %v1048 = vld [vmem:[%s566 + $0xa8] sm:$0xff]
      %v1049 = vld [vmem:[%s566 + $0xb0] sm:$0xff]
      %v1050 = vld [vmem:[%s566 + $0xc0] sm:$0xff]
      %v1051 = vld [vmem:[%s566 + $0xc8] sm:$0xff]
      %v1052 = vld [vmem:[%s566 + $0xd8] sm:$0xff]
      %v1053 = vld [vmem:[%s566 + $0xe0] sm:$0xff]
      %v1054 = vld [vmem:[%s566 + $0xf0] sm:$0xff]
      %v1055 = vld [vmem:[%s566 + $0xf8] sm:$0xff]
      %v1056 = vld [vmem:[%s566 + $0x108] sm:$0xff]
      %v1057 = vld [vmem:[%s566 + $0x110] sm:$0xff]
      %v1058 = vld [vmem:[%s566 + $0x120] sm:$0xff]
      %v1059 = vld [vmem:[%s566 + $0x128] sm:$0xff]
      %v1060 = vld [vmem:[%s566 + $0x138] sm:$0xff]
      %v1061 = vld [vmem:[%s566 + $0x140] sm:$0xff]
      %v1062 = vld [vmem:[%s566 + $0x150] sm:$0xff]
      %v1063 = vld [vmem:[%s566 + $0x158] sm:$0xff]
      %v1064 = vld [vmem:[%s566 + $0x168] sm:$0xff]
      %v1065 = vld [vmem:[%s566 + $0x170] sm:$0xff]
      %v1066 = vld [vmem:[%s566 + $0x1] sm:$0xff]
      %v1067 = vld [vmem:[%s566 + $0x9] sm:$0xff]
      %v1068 = vld [vmem:[%s566 + $0x19] sm:$0xff]
      %v1069 = vld [vmem:[%s566 + $0x21] sm:$0xff]
      %v1070 = vld [vmem:[%s566 + $0x31] sm:$0xff]
      %v1071 = vld [vmem:[%s566 + $0x39] sm:$0xff]
      %v1072 = vld [vmem:[%s566 + $0x49] sm:$0xff]
      %v1073 = vld [vmem:[%s566 + $0x51] sm:$0xff]
      %v1074 = vld [vmem:[%s566 + $0x61] sm:$0xff]
      %v1075 = vld [vmem:[%s566 + $0x69] sm:$0xff]
      %v1076 = vld [vmem:[%s566 + $0x79] sm:$0xff]
      %v1077 = vld [vmem:[%s566 + $0x81] sm:$0xff]
      %v1078 = vld [vmem:[%s566 + $0x91] sm:$0xff]
      %v1079 = vld [vmem:[%s566 + $0x99] sm:$0xff]
      %v1080 = vld [vmem:[%s566 + $0xa9] sm:$0xff]
      %v1081 = vld [vmem:[%s566 + $0xb1] sm:$0xff]
      %v1082 = vld [vmem:[%s566 + $0xc1] sm:$0xff]
      %v1083 = vld [vmem:[%s566 + $0xc9] sm:$0xff]
      %v1084 = vld [vmem:[%s566 + $0xd9] sm:$0xff]
      %v1085 = vld [vmem:[%s566 + $0xe1] sm:$0xff]
      %v1086 = vld [vmem:[%s566 + $0xf1] sm:$0xff]
      %v1087 = vld [vmem:[%s566 + $0xf9] sm:$0xff]
      %v1088 = vld [vmem:[%s566 + $0x109] sm:$0xff]
      %v1089 = vld [vmem:[%s566 + $0x111] sm:$0xff]
      %v1090 = vld [vmem:[%s566 + $0x121] sm:$0xff]
      %v1091 = vld [vmem:[%s566 + $0x129] sm:$0xff]
      %v1092 = vld [vmem:[%s566 + $0x139] sm:$0xff]
      %v1093 = vld [vmem:[%s566 + $0x141] sm:$0xff]
      %v1094 = vld [vmem:[%s566 + $0x151] sm:$0xff]
      %v1095 = vld [vmem:[%s566 + $0x159] sm:$0xff]
      %v1096 = vld [vmem:[%s566 + $0x169] sm:$0xff]
      %v1097 = vld [vmem:[%s566 + $0x171] sm:$0xff]
      %v1098 = vld [vmem:[%s566 + $0x2] sm:$0xff]
      %v1099 = vld [vmem:[%s566 + $0xa] sm:$0xff]
      %v1100 = vld [vmem:[%s566 + $0x1a] sm:$0xff]
      %v1101 = vld [vmem:[%s566 + $0x22] sm:$0xff]
      %v1102 = vld [vmem:[%s566 + $0x32] sm:$0xff]
      %v1103 = vld [vmem:[%s566 + $0x3a] sm:$0xff]
      %v1104 = vld [vmem:[%s566 + $0x4a] sm:$0xff]
      %v1105 = vld [vmem:[%s566 + $0x52] sm:$0xff]
      %v1106 = vld [vmem:[%s566 + $0x62] sm:$0xff]
      %v1107 = vld [vmem:[%s566 + $0x6a] sm:$0xff]
      %v1108 = vld [vmem:[%s566 + $0x7a] sm:$0xff]
      %v1109 = vld [vmem:[%s566 + $0x82] sm:$0xff]
      %v1110 = vld [vmem:[%s566 + $0x92] sm:$0xff]
      %v1111 = vld [vmem:[%s566 + $0x9a] sm:$0xff]
      %v1112 = vld [vmem:[%s566 + $0xaa] sm:$0xff]
      %v1113 = vld [vmem:[%s566 + $0xb2] sm:$0xff]
      %v1114 = vld [vmem:[%s566 + $0xc2] sm:$0xff]
      %v1115 = vld [vmem:[%s566 + $0xca] sm:$0xff]
      %v1116 = vld [vmem:[%s566 + $0xda] sm:$0xff]
      %v1117 = vld [vmem:[%s566 + $0xe2] sm:$0xff]
      %v1118 = vld [vmem:[%s566 + $0xf2] sm:$0xff]
      %v1119 = vld [vmem:[%s566 + $0xfa] sm:$0xff]
      %v1120 = vld [vmem:[%s566 + $0x10a] sm:$0xff]
      %v1121 = vld [vmem:[%s566 + $0x112] sm:$0xff]
      %v1122 = vld [vmem:[%s566 + $0x122] sm:$0xff]
      %v1123 = vld [vmem:[%s566 + $0x12a] sm:$0xff]
      %v1124 = vld [vmem:[%s566 + $0x13a] sm:$0xff]
      %v1125 = vld [vmem:[%s566 + $0x142] sm:$0xff]
      %v1126 = vld [vmem:[%s566 + $0x152] sm:$0xff]
      %v1127 = vld [vmem:[%s566 + $0x15a] sm:$0xff]
      %v1128 = vld [vmem:[%s566 + $0x16a] sm:$0xff]
      %v1129 = vld [vmem:[%s566 + $0x172] sm:$0xff]
      %1162 = vrot.lane.b32.xlu0 %v1066, 4
      %v1163 = vpop.permute.xlu0 %1162
      %1164 = vrot.lane.b32.xlu0 %v1067, 4
      %v1165 = vpop.permute.xlu0 %1164
      %1166 = vrot.lane.b32.xlu0 %v1068, 4
      %v1167 = vpop.permute.xlu0 %1166
      %1168 = vrot.lane.b32.xlu0 %v1069, 4
      %v1169 = vpop.permute.xlu0 %1168
      %1170 = vrot.lane.b32.xlu0 %v1070, 4
      %v1171 = vpop.permute.xlu0 %1170
      %1172 = vrot.lane.b32.xlu0 %v1071, 4
      %v1173 = vpop.permute.xlu0 %1172
      %1174 = vrot.lane.b32.xlu0 %v1072, 4
      %v1175 = vpop.permute.xlu0 %1174
      %1176 = vrot.lane.b32.xlu0 %v1073, 4
      %v1177 = vpop.permute.xlu0 %1176
      %1178 = vrot.lane.b32.xlu0 %v1074, 4
      %v1179 = vpop.permute.xlu0 %1178
      %1180 = vrot.lane.b32.xlu0 %v1075, 4
      %v1181 = vpop.permute.xlu0 %1180
      %1182 = vrot.lane.b32.xlu0 %v1076, 4
      %v1183 = vpop.permute.xlu0 %1182
      %1184 = vrot.lane.b32.xlu0 %v1077, 4
      %v1185 = vpop.permute.xlu0 %1184
      %1186 = vrot.lane.b32.xlu0 %v1078, 4
      %v1187 = vpop.permute.xlu0 %1186
      %1188 = vrot.lane.b32.xlu0 %v1079, 4
      %v1189 = vpop.permute.xlu0 %1188
      %1190 = vrot.lane.b32.xlu0 %v1080, 4
      %v1191 = vpop.permute.xlu0 %1190
      %1192 = vrot.lane.b32.xlu0 %v1081, 4
      %v1193 = vpop.permute.xlu0 %1192
      %1194 = vrot.lane.b32.xlu0 %v1082, 4
      %v1195 = vpop.permute.xlu0 %1194
      %1196 = vrot.lane.b32.xlu0 %v1083, 4
      %v1197 = vpop.permute.xlu0 %1196
      %1198 = vrot.lane.b32.xlu0 %v1084, 4
      %v1199 = vpop.permute.xlu0 %1198
      %1200 = vrot.lane.b32.xlu0 %v1085, 4
      %v1201 = vpop.permute.xlu0 %1200
      %1202 = vrot.lane.b32.xlu0 %v1086, 4
      %v1203 = vpop.permute.xlu0 %1202
      %1204 = vrot.lane.b32.xlu0 %v1087, 4
      %v1205 = vpop.permute.xlu0 %1204
      %1206 = vrot.lane.b32.xlu0 %v1088, 4
      %v1207 = vpop.permute.xlu0 %1206
      %1208 = vrot.lane.b32.xlu0 %v1089, 4
      %v1209 = vpop.permute.xlu0 %1208
      %1210 = vrot.lane.b32.xlu0 %v1090, 4
      %v1211 = vpop.permute.xlu0 %1210
      %1212 = vrot.lane.b32.xlu0 %v1091, 4
      %v1213 = vpop.permute.xlu0 %1212
      %1214 = vrot.lane.b32.xlu0 %v1092, 4
      %v1215 = vpop.permute.xlu0 %1214
      %1216 = vrot.lane.b32.xlu0 %v1093, 4
      %v1217 = vpop.permute.xlu0 %1216
      %1218 = vrot.lane.b32.xlu0 %v1094, 4
      %v1219 = vpop.permute.xlu0 %1218
      %1220 = vrot.lane.b32.xlu0 %v1095, 4
      %v1221 = vpop.permute.xlu0 %1220
      %1222 = vrot.lane.b32.xlu0 %v1096, 4
      %v1223 = vpop.permute.xlu0 %1222
      %1224 = vrot.lane.b32.xlu0 %v1097, 4
      %v1225 = vpop.permute.xlu0 %1224
      %1290 = vrot.lane.b32.xlu0 %v1098, 8
      %v1291 = vpop.permute.xlu0 %1290
      %1292 = vrot.lane.b32.xlu0 %v1099, 8
      %v1293 = vpop.permute.xlu0 %1292
      %1294 = vrot.lane.b32.xlu0 %v1100, 8
      %v1295 = vpop.permute.xlu0 %1294
      %1296 = vrot.lane.b32.xlu0 %v1101, 8
      %v1297 = vpop.permute.xlu0 %1296
      %1298 = vrot.lane.b32.xlu0 %v1102, 8
      %v1299 = vpop.permute.xlu0 %1298
      %1300 = vrot.lane.b32.xlu0 %v1103, 8
      %v1301 = vpop.permute.xlu0 %1300
      %1302 = vrot.lane.b32.xlu0 %v1104, 8
      %v1303 = vpop.permute.xlu0 %1302
      %1304 = vrot.lane.b32.xlu0 %v1105, 8
      %v1305 = vpop.permute.xlu0 %1304
      %1306 = vrot.lane.b32.xlu0 %v1106, 8
      %v1307 = vpop.permute.xlu0 %1306
      %1308 = vrot.lane.b32.xlu0 %v1107, 8
      %v1309 = vpop.permute.xlu0 %1308
      %1310 = vrot.lane.b32.xlu0 %v1108, 8
      %v1311 = vpop.permute.xlu0 %1310
      %1312 = vrot.lane.b32.xlu0 %v1109, 8
      %v1313 = vpop.permute.xlu0 %1312
      %1314 = vrot.lane.b32.xlu0 %v1110, 8
      %v1315 = vpop.permute.xlu0 %1314
      %1316 = vrot.lane.b32.xlu0 %v1111, 8
      %v1317 = vpop.permute.xlu0 %1316
      %1318 = vrot.lane.b32.xlu0 %v1112, 8
      %v1319 = vpop.permute.xlu0 %1318
      %1320 = vrot.lane.b32.xlu0 %v1113, 8
      %v1321 = vpop.permute.xlu0 %1320
      %1322 = vrot.lane.b32.xlu0 %v1114, 8
      %v1323 = vpop.permute.xlu0 %1322
      %1324 = vrot.lane.b32.xlu0 %v1115, 8
      %v1325 = vpop.permute.xlu0 %1324
      %1326 = vrot.lane.b32.xlu0 %v1116, 8
      %v1327 = vpop.permute.xlu0 %1326
      %1328 = vrot.lane.b32.xlu0 %v1117, 8
      %v1329 = vpop.permute.xlu0 %1328
      %1330 = vrot.lane.b32.xlu0 %v1118, 8
      %v1331 = vpop.permute.xlu0 %1330
      %1332 = vrot.lane.b32.xlu0 %v1119, 8
      %v1333 = vpop.permute.xlu0 %1332
      %1334 = vrot.lane.b32.xlu0 %v1120, 8
      %v1335 = vpop.permute.xlu0 %1334
      %1336 = vrot.lane.b32.xlu0 %v1121, 8
      %v1337 = vpop.permute.xlu0 %1336
      %1338 = vrot.lane.b32.xlu0 %v1122, 8
      %v1339 = vpop.permute.xlu0 %1338
      %1340 = vrot.lane.b32.xlu0 %v1123, 8
      %v1341 = vpop.permute.xlu0 %1340
      %1342 = vrot.lane.b32.xlu0 %v1124, 8
      %v1343 = vpop.permute.xlu0 %1342
      %1344 = vrot.lane.b32.xlu0 %v1125, 8
      %v1345 = vpop.permute.xlu0 %1344
      %1346 = vrot.lane.b32.xlu0 %v1126, 8
      %v1347 = vpop.permute.xlu0 %1346
      %1348 = vrot.lane.b32.xlu0 %v1127, 8
      %v1349 = vpop.permute.xlu0 %1348
      %1350 = vrot.lane.b32.xlu0 %v1128, 8
      %v1351 = vpop.permute.xlu0 %1350
      %1352 = vrot.lane.b32.xlu0 %v1129, 8
      %v1353 = vpop.permute.xlu0 %1352
      %v1386 = vsel %vm510, %v1034, %v1163
      %v1387 = vsel %vm510, %v1035, %v1165
      %v1388 = vsel %vm510, %v1036, %v1167
      %v1389 = vsel %vm510, %v1037, %v1169
      %v1390 = vsel %vm510, %v1038, %v1171
      %v1391 = vsel %vm510, %v1039, %v1173
      %v1392 = vsel %vm510, %v1040, %v1175
      %v1393 = vsel %vm510, %v1041, %v1177
      %v1394 = vsel %vm510, %v1042, %v1179
      %v1395 = vsel %vm510, %v1043, %v1181
      %v1396 = vsel %vm510, %v1044, %v1183
      %v1397 = vsel %vm510, %v1045, %v1185
      %v1398 = vsel %vm510, %v1046, %v1187
      %v1399 = vsel %vm510, %v1047, %v1189
      %v1400 = vsel %vm510, %v1048, %v1191
      %v1401 = vsel %vm510, %v1049, %v1193
      %v1402 = vsel %vm510, %v1050, %v1195
      %v1403 = vsel %vm510, %v1051, %v1197
      %v1404 = vsel %vm510, %v1052, %v1199
      %v1405 = vsel %vm510, %v1053, %v1201
      %v1406 = vsel %vm510, %v1054, %v1203
      %v1407 = vsel %vm510, %v1055, %v1205
      %v1408 = vsel %vm510, %v1056, %v1207
      %v1409 = vsel %vm510, %v1057, %v1209
      %v1410 = vsel %vm510, %v1058, %v1211
      %v1411 = vsel %vm510, %v1059, %v1213
      %v1412 = vsel %vm510, %v1060, %v1215
      %v1413 = vsel %vm510, %v1061, %v1217
      %v1414 = vsel %vm510, %v1062, %v1219
      %v1415 = vsel %vm510, %v1063, %v1221
      %v1416 = vsel %vm510, %v1064, %v1223
      %v1417 = vsel %vm510, %v1065, %v1225
      %v1418 = vsel %vm983, %v1386, %v1291
      %v1419 = vsel %vm983, %v1387, %v1293
      %v1420 = vsel %vm983, %v1388, %v1295
      %v1421 = vsel %vm983, %v1389, %v1297
      %v1422 = vsel %vm983, %v1390, %v1299
      %v1423 = vsel %vm983, %v1391, %v1301
      %v1424 = vsel %vm983, %v1392, %v1303
      %v1425 = vsel %vm983, %v1393, %v1305
      %v1426 = vsel %vm983, %v1394, %v1307
      %v1427 = vsel %vm983, %v1395, %v1309
      %v1428 = vsel %vm983, %v1396, %v1311
      %v1429 = vsel %vm983, %v1397, %v1313
      %v1430 = vsel %vm983, %v1398, %v1315
      %v1431 = vsel %vm983, %v1399, %v1317
      %v1432 = vsel %vm983, %v1400, %v1319
      %v1433 = vsel %vm983, %v1401, %v1321
      %v1434 = vsel %vm983, %v1402, %v1323
      %v1435 = vsel %vm983, %v1403, %v1325
      %v1436 = vsel %vm983, %v1404, %v1327
      %v1437 = vsel %vm983, %v1405, %v1329
      %v1438 = vsel %vm983, %v1406, %v1331
      %v1439 = vsel %vm983, %v1407, %v1333
      %v1440 = vsel %vm983, %v1408, %v1335
      %v1441 = vsel %vm983, %v1409, %v1337
      %v1442 = vsel %vm983, %v1410, %v1339
      %v1443 = vsel %vm983, %v1411, %v1341
      %v1444 = vsel %vm983, %v1412, %v1343
      %v1445 = vsel %vm983, %v1413, %v1345
      %v1446 = vsel %vm983, %v1414, %v1347
      %v1447 = vsel %vm983, %v1415, %v1349
      %v1448 = vsel %vm983, %v1416, %v1351
      %v1449 = vsel %vm983, %v1417, %v1353
      %v1450 = vpack.c.bf16 %v1419, %v1418
      %v1451 = vpack.c.bf16 %v1421, %v1420
      %v1452 = vpack.c.bf16 %v1423, %v1422
      %v1453 = vpack.c.bf16 %v1425, %v1424
      %v1454 = vpack.c.bf16 %v1427, %v1426
      %v1455 = vpack.c.bf16 %v1429, %v1428
      %v1456 = vpack.c.bf16 %v1431, %v1430
      %v1457 = vpack.c.bf16 %v1433, %v1432
      %v1458 = vpack.c.bf16 %v1435, %v1434
      %v1459 = vpack.c.bf16 %v1437, %v1436
      %v1460 = vpack.c.bf16 %v1439, %v1438
      %v1461 = vpack.c.bf16 %v1441, %v1440
      %v1462 = vpack.c.bf16 %v1443, %v1442
      %v1463 = vpack.c.bf16 %v1445, %v1444
      %v1464 = vpack.c.bf16 %v1447, %v1446
      %v1465 = vpack.c.bf16 %v1449, %v1448
      %s1466 = scalar_lea.vmem %s3, 8
      %v1467 = vld [vmem:[%s1466] sm:$0xf]
      %v1468 = vld [vmem:[%s1466 + $0x4] sm:$0x3]
      %v1471 = vunpack.c.l.b16 %v1467
      %v1472 = vunpack.c.l.b16 %v1468
      %v1473 = vpack.c.b16 %v1472, %v1471
      %vm1474 = vcmask 97280
      %v1476 = vsel %vm1474, %v1450, 0
      %v1479 = vsel %vm1474, %v1451, 0
      %v1482 = vsel %vm1474, %v1452, 0
      %v1485 = vsel %vm1474, %v1453, 0
      %v1488 = vsel %vm1474, %v1454, 0
      %v1491 = vsel %vm1474, %v1455, 0
      %v1494 = vsel %vm1474, %v1456, 0
      %v1497 = vsel %vm1474, %v1457, 0
      %v1500 = vsel %vm1474, %v1458, 0
      %v1503 = vsel %vm1474, %v1459, 0
      %v1506 = vsel %vm1474, %v1460, 0
      %v1509 = vsel %vm1474, %v1461, 0
      %v1512 = vsel %vm1474, %v1462, 0
      %v1515 = vsel %vm1474, %v1463, 0
      %v1518 = vsel %vm1474, %v1464, 0
      %v1521 = vsel %vm1474, %v1465, 0
      %vm1523 = vcmask 1045504
      %v1525 = vsel %vm1523, %v1473, 0
      %1527 = vmatpush.bf16.msra.mxu0 0
      %1528 = vmatpush.bf16.msra.mxu0 0
      %1529 = vmatpush.bf16.msra.mxu0 0
      %1530 = vmatpush.bf16.msra.mxu0 0
      %1531 = vmatpush.bf16.msra.mxu0 0
      %1532 = vmatpush.bf16.msra.mxu0 0
      %1533 = vmatpush.bf16.msra.mxu0 0
      %1534 = vmatpush.bf16.msra.mxu0 %v1525
      %1535 = vmatmul.bf16.gmra.mxu0 %v1476
      %v1536 = vpop.f32.mrf.mxu0
      %v1537 = vadd.f32 0.0, %v1536
      %v1538 = vpop.f32.mrf.mxu0
      %v1539 = vadd.f32 0.0, %v1538
      %1540 = vmatmul.bf16.gmra.mxu0 %v1479
      %v1541 = vpop.f32.mrf.mxu0
      %v1542 = vadd.f32 0.0, %v1541
      %v1543 = vpop.f32.mrf.mxu0
      %v1544 = vadd.f32 0.0, %v1543
      %1545 = vmatmul.bf16.gmra.mxu0 %v1482
      %v1546 = vpop.f32.mrf.mxu0
      %v1547 = vadd.f32 0.0, %v1546
      %v1548 = vpop.f32.mrf.mxu0
      %v1549 = vadd.f32 0.0, %v1548
      %1550 = vmatmul.bf16.gmra.mxu0 %v1485
      %v1551 = vpop.f32.mrf.mxu0
      %v1552 = vadd.f32 0.0, %v1551
      %v1553 = vpop.f32.mrf.mxu0
      %v1554 = vadd.f32 0.0, %v1553
      %1555 = vmatmul.bf16.gmra.mxu0 %v1488
      %v1556 = vpop.f32.mrf.mxu0
      %v1557 = vadd.f32 0.0, %v1556
      %v1558 = vpop.f32.mrf.mxu0
      %v1559 = vadd.f32 0.0, %v1558
      %1560 = vmatmul.bf16.gmra.mxu0 %v1491
      %v1561 = vpop.f32.mrf.mxu0
      %v1562 = vadd.f32 0.0, %v1561
      %v1563 = vpop.f32.mrf.mxu0
      %v1564 = vadd.f32 0.0, %v1563
      %1565 = vmatmul.bf16.gmra.mxu0 %v1494
      %v1566 = vpop.f32.mrf.mxu0
      %v1567 = vadd.f32 0.0, %v1566
      %v1568 = vpop.f32.mrf.mxu0
      %v1569 = vadd.f32 0.0, %v1568
      %1570 = vmatmul.bf16.gmra.mxu0 %v1497
      %v1571 = vpop.f32.mrf.mxu0
      %v1572 = vadd.f32 0.0, %v1571
      %v1573 = vpop.f32.mrf.mxu0
      %v1574 = vadd.f32 0.0, %v1573
      %1575 = vmatmul.bf16.gmra.mxu0 %v1500
      %v1576 = vpop.f32.mrf.mxu0
      %v1577 = vadd.f32 0.0, %v1576
      %v1578 = vpop.f32.mrf.mxu0
      %v1579 = vadd.f32 0.0, %v1578
      %1580 = vmatmul.bf16.gmra.mxu0 %v1503
      %v1581 = vpop.f32.mrf.mxu0
      %v1582 = vadd.f32 0.0, %v1581
      %v1583 = vpop.f32.mrf.mxu0
      %v1584 = vadd.f32 0.0, %v1583
      %1585 = vmatmul.bf16.gmra.mxu0 %v1506
      %v1586 = vpop.f32.mrf.mxu0
      %v1587 = vadd.f32 0.0, %v1586
      %v1588 = vpop.f32.mrf.mxu0
      %v1589 = vadd.f32 0.0, %v1588
      %1590 = vmatmul.bf16.gmra.mxu0 %v1509
      %v1591 = vpop.f32.mrf.mxu0
      %v1592 = vadd.f32 0.0, %v1591
      %v1593 = vpop.f32.mrf.mxu0
      %v1594 = vadd.f32 0.0, %v1593
      %1595 = vmatmul.bf16.gmra.mxu0 %v1512
      %v1596 = vpop.f32.mrf.mxu0
      %v1597 = vadd.f32 0.0, %v1596
      %v1598 = vpop.f32.mrf.mxu0
      %v1599 = vadd.f32 0.0, %v1598
      %1600 = vmatmul.bf16.gmra.mxu0 %v1515
      %v1601 = vpop.f32.mrf.mxu0
      %v1602 = vadd.f32 0.0, %v1601
      %v1603 = vpop.f32.mrf.mxu0
      %v1604 = vadd.f32 0.0, %v1603
      %1605 = vmatmul.bf16.gmra.mxu0 %v1518
      %v1606 = vpop.f32.mrf.mxu0
      %v1607 = vadd.f32 0.0, %v1606
      %v1608 = vpop.f32.mrf.mxu0
      %v1609 = vadd.f32 0.0, %v1608
      %1610 = vmatmul.bf16.gmra.mxu0 %v1521
      %v1611 = vpop.f32.mrf.mxu0
      %v1612 = vadd.f32 0.0, %v1611
      %v1613 = vpop.f32.mrf.mxu0
      %v1614 = vadd.f32 0.0, %v1613
      %1615 = vdwg.mxu0
      %v1618 = vunpack.c.l.b16 %v1032
      %v1619 = vunpack.c.l.b16 %v1033
      %v1620 = vpack.c.b16 %v1619, %v1618
      %v1622 = vsel %vm1474, %v1016, 0
      %v1625 = vsel %vm1474, %v1017, 0
      %v1628 = vsel %vm1474, %v1018, 0
      %v1631 = vsel %vm1474, %v1019, 0
      %v1634 = vsel %vm1474, %v1020, 0
      %v1637 = vsel %vm1474, %v1021, 0
      %v1640 = vsel %vm1474, %v1022, 0
      %v1643 = vsel %vm1474, %v1023, 0
      %v1646 = vsel %vm1474, %v1024, 0
      %v1649 = vsel %vm1474, %v1025, 0
      %v1652 = vsel %vm1474, %v1026, 0
      %v1655 = vsel %vm1474, %v1027, 0
      %v1658 = vsel %vm1474, %v1028, 0
      %v1661 = vsel %vm1474, %v1029, 0
      %v1664 = vsel %vm1474, %v1030, 0
      %v1667 = vsel %vm1474, %v1031, 0
      %v1670 = vsel %vm1523, %v1620, 0
      %1672 = vmatpush.bf16.msra.mxu0 0
      %1673 = vmatpush.bf16.msra.mxu0 0
      %1674 = vmatpush.bf16.msra.mxu0 0
      %1675 = vmatpush.bf16.msra.mxu0 0
      %1676 = vmatpush.bf16.msra.mxu0 0
      %1677 = vmatpush.bf16.msra.mxu0 0
      %1678 = vmatpush.bf16.msra.mxu0 0
      %1679 = vmatpush.bf16.msra.mxu0 %v1670
      %1680 = vmatmul.bf16.gmra.mxu0 %v1622
      %v1681 = vpop.f32.mrf.mxu0
      %v1682 = vadd.f32 %v1537, %v1681
      %v1683 = vpop.f32.mrf.mxu0
      %v1684 = vadd.f32 %v1539, %v1683
      %1685 = vmatmul.bf16.gmra.mxu0 %v1625
      %v1686 = vpop.f32.mrf.mxu0
      %v1687 = vadd.f32 %v1542, %v1686
      %v1688 = vpop.f32.mrf.mxu0
      %v1689 = vadd.f32 %v1544, %v1688
      %1690 = vmatmul.bf16.gmra.mxu0 %v1628
      %v1691 = vpop.f32.mrf.mxu0
      %v1692 = vadd.f32 %v1547, %v1691
      %v1693 = vpop.f32.mrf.mxu0
      %v1694 = vadd.f32 %v1549, %v1693
      %1695 = vmatmul.bf16.gmra.mxu0 %v1631
      %v1696 = vpop.f32.mrf.mxu0
      %v1697 = vadd.f32 %v1552, %v1696
      %v1698 = vpop.f32.mrf.mxu0
      %v1699 = vadd.f32 %v1554, %v1698
      %1700 = vmatmul.bf16.gmra.mxu0 %v1634
      %v1701 = vpop.f32.mrf.mxu0
      %v1702 = vadd.f32 %v1557, %v1701
      %v1703 = vpop.f32.mrf.mxu0
      %v1704 = vadd.f32 %v1559, %v1703
      %1705 = vmatmul.bf16.gmra.mxu0 %v1637
      %v1706 = vpop.f32.mrf.mxu0
      %v1707 = vadd.f32 %v1562, %v1706
      %v1708 = vpop.f32.mrf.mxu0
      %v1709 = vadd.f32 %v1564, %v1708
      %1710 = vmatmul.bf16.gmra.mxu0 %v1640
      %v1711 = vpop.f32.mrf.mxu0
      %v1712 = vadd.f32 %v1567, %v1711
      %v1713 = vpop.f32.mrf.mxu0
      %v1714 = vadd.f32 %v1569, %v1713
      %1715 = vmatmul.bf16.gmra.mxu0 %v1643
      %v1716 = vpop.f32.mrf.mxu0
      %v1717 = vadd.f32 %v1572, %v1716
      %v1718 = vpop.f32.mrf.mxu0
      %v1719 = vadd.f32 %v1574, %v1718
      %1720 = vmatmul.bf16.gmra.mxu0 %v1646
      %v1721 = vpop.f32.mrf.mxu0
      %v1722 = vadd.f32 %v1577, %v1721
      %v1723 = vpop.f32.mrf.mxu0
      %v1724 = vadd.f32 %v1579, %v1723
      %1725 = vmatmul.bf16.gmra.mxu0 %v1649
      %v1726 = vpop.f32.mrf.mxu0
      %v1727 = vadd.f32 %v1582, %v1726
      %v1728 = vpop.f32.mrf.mxu0
      %v1729 = vadd.f32 %v1584, %v1728
      %1730 = vmatmul.bf16.gmra.mxu0 %v1652
      %v1731 = vpop.f32.mrf.mxu0
      %v1732 = vadd.f32 %v1587, %v1731
      %v1733 = vpop.f32.mrf.mxu0
      %v1734 = vadd.f32 %v1589, %v1733
      %1735 = vmatmul.bf16.gmra.mxu0 %v1655
      %v1736 = vpop.f32.mrf.mxu0
      %v1737 = vadd.f32 %v1592, %v1736
      %v1738 = vpop.f32.mrf.mxu0
      %v1739 = vadd.f32 %v1594, %v1738
      %1740 = vmatmul.bf16.gmra.mxu0 %v1658
      %v1741 = vpop.f32.mrf.mxu0
      %v1742 = vadd.f32 %v1597, %v1741
      %v1743 = vpop.f32.mrf.mxu0
      %v1744 = vadd.f32 %v1599, %v1743
      %1745 = vmatmul.bf16.gmra.mxu0 %v1661
      %v1746 = vpop.f32.mrf.mxu0
      %v1747 = vadd.f32 %v1602, %v1746
      %v1748 = vpop.f32.mrf.mxu0
      %v1749 = vadd.f32 %v1604, %v1748
      %1750 = vmatmul.bf16.gmra.mxu0 %v1664
      %v1751 = vpop.f32.mrf.mxu0
      %v1752 = vadd.f32 %v1607, %v1751
      %v1753 = vpop.f32.mrf.mxu0
      %v1754 = vadd.f32 %v1609, %v1753
      %1755 = vmatmul.bf16.gmra.mxu0 %v1667
      %v1756 = vpop.f32.mrf.mxu0
      %v1757 = vadd.f32 %v1612, %v1756
      %v1758 = vpop.f32.mrf.mxu0
      %v1759 = vadd.f32 %v1614, %v1758
      %1760 = vdwg.mxu0
      %s1761 = scalar_lea.vmem [#allocation2], 48
      %v1762 = vld [vmem:[%s1761] sm:$0xff]
      %v1763 = vld [vmem:[%s1761 + $0x8] sm:$0xff]
      %v1764 = vld [vmem:[%s1761 + $0x18] sm:$0xff]
      %v1765 = vld [vmem:[%s1761 + $0x20] sm:$0xff]
      %v1766 = vld [vmem:[%s1761 + $0x30] sm:$0xff]
      %v1767 = vld [vmem:[%s1761 + $0x38] sm:$0xff]
      %v1768 = vld [vmem:[%s1761 + $0x48] sm:$0xff]
      %v1769 = vld [vmem:[%s1761 + $0x50] sm:$0xff]
      %v1770 = vld [vmem:[%s1761 + $0x60] sm:$0xff]
      %v1771 = vld [vmem:[%s1761 + $0x68] sm:$0xff]
      %v1772 = vld [vmem:[%s1761 + $0x78] sm:$0xff]
      %v1773 = vld [vmem:[%s1761 + $0x80] sm:$0xff]
      %v1774 = vld [vmem:[%s1761 + $0x90] sm:$0xff]
      %v1775 = vld [vmem:[%s1761 + $0x98] sm:$0xff]
      %v1776 = vld [vmem:[%s1761 + $0xa8] sm:$0xff]
      %v1777 = vld [vmem:[%s1761 + $0xb0] sm:$0xff]
      %v1778 = vld [vmem:[%s1761 + $0xc0] sm:$0xff]
      %v1779 = vld [vmem:[%s1761 + $0xc8] sm:$0xff]
      %v1780 = vld [vmem:[%s1761 + $0xd8] sm:$0xff]
      %v1781 = vld [vmem:[%s1761 + $0xe0] sm:$0xff]
      %v1782 = vld [vmem:[%s1761 + $0xf0] sm:$0xff]
      %v1783 = vld [vmem:[%s1761 + $0xf8] sm:$0xff]
      %v1784 = vld [vmem:[%s1761 + $0x108] sm:$0xff]
      %v1785 = vld [vmem:[%s1761 + $0x110] sm:$0xff]
      %v1786 = vld [vmem:[%s1761 + $0x120] sm:$0xff]
      %v1787 = vld [vmem:[%s1761 + $0x128] sm:$0xff]
      %v1788 = vld [vmem:[%s1761 + $0x138] sm:$0xff]
      %v1789 = vld [vmem:[%s1761 + $0x140] sm:$0xff]
      %v1790 = vld [vmem:[%s1761 + $0x150] sm:$0xff]
      %v1791 = vld [vmem:[%s1761 + $0x158] sm:$0xff]
      %v1792 = vld [vmem:[%s1761 + $0x168] sm:$0xff]
      %v1793 = vld [vmem:[%s1761 + $0x170] sm:$0xff]
      %v1794 = vld [vmem:[%s1761 + $0x1] sm:$0xff]
      %v1795 = vld [vmem:[%s1761 + $0x9] sm:$0xff]
      %v1796 = vld [vmem:[%s1761 + $0x19] sm:$0xff]
      %v1797 = vld [vmem:[%s1761 + $0x21] sm:$0xff]
      %v1798 = vld [vmem:[%s1761 + $0x31] sm:$0xff]
      %v1799 = vld [vmem:[%s1761 + $0x39] sm:$0xff]
      %v1800 = vld [vmem:[%s1761 + $0x49] sm:$0xff]
      %v1801 = vld [vmem:[%s1761 + $0x51] sm:$0xff]
      %v1802 = vld [vmem:[%s1761 + $0x61] sm:$0xff]
      %v1803 = vld [vmem:[%s1761 + $0x69] sm:$0xff]
      %v1804 = vld [vmem:[%s1761 + $0x79] sm:$0xff]
      %v1805 = vld [vmem:[%s1761 + $0x81] sm:$0xff]
      %v1806 = vld [vmem:[%s1761 + $0x91] sm:$0xff]
      %v1807 = vld [vmem:[%s1761 + $0x99] sm:$0xff]
      %v1808 = vld [vmem:[%s1761 + $0xa9] sm:$0xff]
      %v1809 = vld [vmem:[%s1761 + $0xb1] sm:$0xff]
      %v1810 = vld [vmem:[%s1761 + $0xc1] sm:$0xff]
      %v1811 = vld [vmem:[%s1761 + $0xc9] sm:$0xff]
      %v1812 = vld [vmem:[%s1761 + $0xd9] sm:$0xff]
      %v1813 = vld [vmem:[%s1761 + $0xe1] sm:$0xff]
      %v1814 = vld [vmem:[%s1761 + $0xf1] sm:$0xff]
      %v1815 = vld [vmem:[%s1761 + $0xf9] sm:$0xff]
      %v1816 = vld [vmem:[%s1761 + $0x109] sm:$0xff]
      %v1817 = vld [vmem:[%s1761 + $0x111] sm:$0xff]
      %v1818 = vld [vmem:[%s1761 + $0x121] sm:$0xff]
      %v1819 = vld [vmem:[%s1761 + $0x129] sm:$0xff]
      %v1820 = vld [vmem:[%s1761 + $0x139] sm:$0xff]
      %v1821 = vld [vmem:[%s1761 + $0x141] sm:$0xff]
      %v1822 = vld [vmem:[%s1761 + $0x151] sm:$0xff]
      %v1823 = vld [vmem:[%s1761 + $0x159] sm:$0xff]
      %v1824 = vld [vmem:[%s1761 + $0x169] sm:$0xff]
      %v1825 = vld [vmem:[%s1761 + $0x171] sm:$0xff]
      %v1826 = vld [vmem:[%s1761 + $0x2] sm:$0xff]
      %v1827 = vld [vmem:[%s1761 + $0xa] sm:$0xff]
      %v1828 = vld [vmem:[%s1761 + $0x1a] sm:$0xff]
      %v1829 = vld [vmem:[%s1761 + $0x22] sm:$0xff]
      %v1830 = vld [vmem:[%s1761 + $0x32] sm:$0xff]
      %v1831 = vld [vmem:[%s1761 + $0x3a] sm:$0xff]
      %v1832 = vld [vmem:[%s1761 + $0x4a] sm:$0xff]
      %v1833 = vld [vmem:[%s1761 + $0x52] sm:$0xff]
      %v1834 = vld [vmem:[%s1761 + $0x62] sm:$0xff]
      %v1835 = vld [vmem:[%s1761 + $0x6a] sm:$0xff]
      %v1836 = vld [vmem:[%s1761 + $0x7a] sm:$0xff]
      %v1837 = vld [vmem:[%s1761 + $0x82] sm:$0xff]
      %v1838 = vld [vmem:[%s1761 + $0x92] sm:$0xff]
      %v1839 = vld [vmem:[%s1761 + $0x9a] sm:$0xff]
      %v1840 = vld [vmem:[%s1761 + $0xaa] sm:$0xff]
      %v1841 = vld [vmem:[%s1761 + $0xb2] sm:$0xff]
      %v1842 = vld [vmem:[%s1761 + $0xc2] sm:$0xff]
      %v1843 = vld [vmem:[%s1761 + $0xca] sm:$0xff]
      %v1844 = vld [vmem:[%s1761 + $0xda] sm:$0xff]
      %v1845 = vld [vmem:[%s1761 + $0xe2] sm:$0xff]
      %v1846 = vld [vmem:[%s1761 + $0xf2] sm:$0xff]
      %v1847 = vld [vmem:[%s1761 + $0xfa] sm:$0xff]
      %v1848 = vld [vmem:[%s1761 + $0x10a] sm:$0xff]
      %v1849 = vld [vmem:[%s1761 + $0x112] sm:$0xff]
      %v1850 = vld [vmem:[%s1761 + $0x122] sm:$0xff]
      %v1851 = vld [vmem:[%s1761 + $0x12a] sm:$0xff]
      %v1852 = vld [vmem:[%s1761 + $0x13a] sm:$0xff]
      %v1853 = vld [vmem:[%s1761 + $0x142] sm:$0xff]
      %v1854 = vld [vmem:[%s1761 + $0x152] sm:$0xff]
      %v1855 = vld [vmem:[%s1761 + $0x15a] sm:$0xff]
      %v1856 = vld [vmem:[%s1761 + $0x16a] sm:$0xff]
      %v1857 = vld [vmem:[%s1761 + $0x172] sm:$0xff]
      %1890 = vrot.lane.b32.xlu0 %v1794, 4
      %v1891 = vpop.permute.xlu0 %1890
      %1892 = vrot.lane.b32.xlu0 %v1795, 4
      %v1893 = vpop.permute.xlu0 %1892
      %1894 = vrot.lane.b32.xlu0 %v1796, 4
      %v1895 = vpop.permute.xlu0 %1894
      %1896 = vrot.lane.b32.xlu0 %v1797, 4
      %v1897 = vpop.permute.xlu0 %1896
      %1898 = vrot.lane.b32.xlu0 %v1798, 4
      %v1899 = vpop.permute.xlu0 %1898
      %1900 = vrot.lane.b32.xlu0 %v1799, 4
      %v1901 = vpop.permute.xlu0 %1900
      %1902 = vrot.lane.b32.xlu0 %v1800, 4
      %v1903 = vpop.permute.xlu0 %1902
      %1904 = vrot.lane.b32.xlu0 %v1801, 4
      %v1905 = vpop.permute.xlu0 %1904
      %1906 = vrot.lane.b32.xlu0 %v1802, 4
      %v1907 = vpop.permute.xlu0 %1906
      %1908 = vrot.lane.b32.xlu0 %v1803, 4
      %v1909 = vpop.permute.xlu0 %1908
      %1910 = vrot.lane.b32.xlu0 %v1804, 4
      %v1911 = vpop.permute.xlu0 %1910
      %1912 = vrot.lane.b32.xlu0 %v1805, 4
      %v1913 = vpop.permute.xlu0 %1912
      %1914 = vrot.lane.b32.xlu0 %v1806, 4
      %v1915 = vpop.permute.xlu0 %1914
      %1916 = vrot.lane.b32.xlu0 %v1807, 4
      %v1917 = vpop.permute.xlu0 %1916
      %1918 = vrot.lane.b32.xlu0 %v1808, 4
      %v1919 = vpop.permute.xlu0 %1918
      %1920 = vrot.lane.b32.xlu0 %v1809, 4
      %v1921 = vpop.permute.xlu0 %1920
      %1922 = vrot.lane.b32.xlu0 %v1810, 4
      %v1923 = vpop.permute.xlu0 %1922
      %1924 = vrot.lane.b32.xlu0 %v1811, 4
      %v1925 = vpop.permute.xlu0 %1924
      %1926 = vrot.lane.b32.xlu0 %v1812, 4
      %v1927 = vpop.permute.xlu0 %1926
      %1928 = vrot.lane.b32.xlu0 %v1813, 4
      %v1929 = vpop.permute.xlu0 %1928
      %1930 = vrot.lane.b32.xlu0 %v1814, 4
      %v1931 = vpop.permute.xlu0 %1930
      %1932 = vrot.lane.b32.xlu0 %v1815, 4
      %v1933 = vpop.permute.xlu0 %1932
      %1934 = vrot.lane.b32.xlu0 %v1816, 4
      %v1935 = vpop.permute.xlu0 %1934
      %1936 = vrot.lane.b32.xlu0 %v1817, 4
      %v1937 = vpop.permute.xlu0 %1936
      %1938 = vrot.lane.b32.xlu0 %v1818, 4
      %v1939 = vpop.permute.xlu0 %1938
      %1940 = vrot.lane.b32.xlu0 %v1819, 4
      %v1941 = vpop.permute.xlu0 %1940
      %1942 = vrot.lane.b32.xlu0 %v1820, 4
      %v1943 = vpop.permute.xlu0 %1942
      %1944 = vrot.lane.b32.xlu0 %v1821, 4
      %v1945 = vpop.permute.xlu0 %1944
      %1946 = vrot.lane.b32.xlu0 %v1822, 4
      %v1947 = vpop.permute.xlu0 %1946
      %1948 = vrot.lane.b32.xlu0 %v1823, 4
      %v1949 = vpop.permute.xlu0 %1948
      %1950 = vrot.lane.b32.xlu0 %v1824, 4
      %v1951 = vpop.permute.xlu0 %1950
      %1952 = vrot.lane.b32.xlu0 %v1825, 4
      %v1953 = vpop.permute.xlu0 %1952
      %2018 = vrot.lane.b32.xlu0 %v1826, 8
      %v2019 = vpop.permute.xlu0 %2018
      %2020 = vrot.lane.b32.xlu0 %v1827, 8
      %v2021 = vpop.permute.xlu0 %2020
      %2022 = vrot.lane.b32.xlu0 %v1828, 8
      %v2023 = vpop.permute.xlu0 %2022
      %2024 = vrot.lane.b32.xlu0 %v1829, 8
      %v2025 = vpop.permute.xlu0 %2024
      %2026 = vrot.lane.b32.xlu0 %v1830, 8
      %v2027 = vpop.permute.xlu0 %2026
      %2028 = vrot.lane.b32.xlu0 %v1831, 8
      %v2029 = vpop.permute.xlu0 %2028
      %2030 = vrot.lane.b32.xlu0 %v1832, 8
      %v2031 = vpop.permute.xlu0 %2030
      %2032 = vrot.lane.b32.xlu0 %v1833, 8
      %v2033 = vpop.permute.xlu0 %2032
      %2034 = vrot.lane.b32.xlu0 %v1834, 8
      %v2035 = vpop.permute.xlu0 %2034
      %2036 = vrot.lane.b32.xlu0 %v1835, 8
      %v2037 = vpop.permute.xlu0 %2036
      %2038 = vrot.lane.b32.xlu0 %v1836, 8
      %v2039 = vpop.permute.xlu0 %2038
      %2040 = vrot.lane.b32.xlu0 %v1837, 8
      %v2041 = vpop.permute.xlu0 %2040
      %2042 = vrot.lane.b32.xlu0 %v1838, 8
      %v2043 = vpop.permute.xlu0 %2042
      %2044 = vrot.lane.b32.xlu0 %v1839, 8
      %v2045 = vpop.permute.xlu0 %2044
      %2046 = vrot.lane.b32.xlu0 %v1840, 8
      %v2047 = vpop.permute.xlu0 %2046
      %2048 = vrot.lane.b32.xlu0 %v1841, 8
      %v2049 = vpop.permute.xlu0 %2048
      %2050 = vrot.lane.b32.xlu0 %v1842, 8
      %v2051 = vpop.permute.xlu0 %2050
      %2052 = vrot.lane.b32.xlu0 %v1843, 8
      %v2053 = vpop.permute.xlu0 %2052
      %2054 = vrot.lane.b32.xlu0 %v1844, 8
      %v2055 = vpop.permute.xlu0 %2054
      %2056 = vrot.lane.b32.xlu0 %v1845, 8
      %v2057 = vpop.permute.xlu0 %2056
      %2058 = vrot.lane.b32.xlu0 %v1846, 8
      %v2059 = vpop.permute.xlu0 %2058
      %2060 = vrot.lane.b32.xlu0 %v1847, 8
      %v2061 = vpop.permute.xlu0 %2060
      %2062 = vrot.lane.b32.xlu0 %v1848, 8
      %v2063 = vpop.permute.xlu0 %2062
      %2064 = vrot.lane.b32.xlu0 %v1849, 8
      %v2065 = vpop.permute.xlu0 %2064
      %2066 = vrot.lane.b32.xlu0 %v1850, 8
      %v2067 = vpop.permute.xlu0 %2066
      %2068 = vrot.lane.b32.xlu0 %v1851, 8
      %v2069 = vpop.permute.xlu0 %2068
      %2070 = vrot.lane.b32.xlu0 %v1852, 8
      %v2071 = vpop.permute.xlu0 %2070
      %2072 = vrot.lane.b32.xlu0 %v1853, 8
      %v2073 = vpop.permute.xlu0 %2072
      %2074 = vrot.lane.b32.xlu0 %v1854, 8
      %v2075 = vpop.permute.xlu0 %2074
      %2076 = vrot.lane.b32.xlu0 %v1855, 8
      %v2077 = vpop.permute.xlu0 %2076
      %2078 = vrot.lane.b32.xlu0 %v1856, 8
      %v2079 = vpop.permute.xlu0 %2078
      %2080 = vrot.lane.b32.xlu0 %v1857, 8
      %v2081 = vpop.permute.xlu0 %2080
      %v2114 = vsel %vm510, %v1762, %v1891
      %v2115 = vsel %vm510, %v1763, %v1893
      %v2116 = vsel %vm510, %v1764, %v1895
      %v2117 = vsel %vm510, %v1765, %v1897
      %v2118 = vsel %vm510, %v1766, %v1899
      %v2119 = vsel %vm510, %v1767, %v1901
      %v2120 = vsel %vm510, %v1768, %v1903
      %v2121 = vsel %vm510, %v1769, %v1905
      %v2122 = vsel %vm510, %v1770, %v1907
      %v2123 = vsel %vm510, %v1771, %v1909
      %v2124 = vsel %vm510, %v1772, %v1911
      %v2125 = vsel %vm510, %v1773, %v1913
      %v2126 = vsel %vm510, %v1774, %v1915
      %v2127 = vsel %vm510, %v1775, %v1917
      %v2128 = vsel %vm510, %v1776, %v1919
      %v2129 = vsel %vm510, %v1777, %v1921
      %v2130 = vsel %vm510, %v1778, %v1923
      %v2131 = vsel %vm510, %v1779, %v1925
      %v2132 = vsel %vm510, %v1780, %v1927
      %v2133 = vsel %vm510, %v1781, %v1929
      %v2134 = vsel %vm510, %v1782, %v1931
      %v2135 = vsel %vm510, %v1783, %v1933
      %v2136 = vsel %vm510, %v1784, %v1935
      %v2137 = vsel %vm510, %v1785, %v1937
      %v2138 = vsel %vm510, %v1786, %v1939
      %v2139 = vsel %vm510, %v1787, %v1941
      %v2140 = vsel %vm510, %v1788, %v1943
      %v2141 = vsel %vm510, %v1789, %v1945
      %v2142 = vsel %vm510, %v1790, %v1947
      %v2143 = vsel %vm510, %v1791, %v1949
      %v2144 = vsel %vm510, %v1792, %v1951
      %v2145 = vsel %vm510, %v1793, %v1953
      %v2146 = vsel %vm983, %v2114, %v2019
      %v2147 = vsel %vm983, %v2115, %v2021
      %v2148 = vsel %vm983, %v2116, %v2023
      %v2149 = vsel %vm983, %v2117, %v2025
      %v2150 = vsel %vm983, %v2118, %v2027
      %v2151 = vsel %vm983, %v2119, %v2029
      %v2152 = vsel %vm983, %v2120, %v2031
      %v2153 = vsel %vm983, %v2121, %v2033
      %v2154 = vsel %vm983, %v2122, %v2035
      %v2155 = vsel %vm983, %v2123, %v2037
      %v2156 = vsel %vm983, %v2124, %v2039
      %v2157 = vsel %vm983, %v2125, %v2041
      %v2158 = vsel %vm983, %v2126, %v2043
      %v2159 = vsel %vm983, %v2127, %v2045
      %v2160 = vsel %vm983, %v2128, %v2047
      %v2161 = vsel %vm983, %v2129, %v2049
      %v2162 = vsel %vm983, %v2130, %v2051
      %v2163 = vsel %vm983, %v2131, %v2053
      %v2164 = vsel %vm983, %v2132, %v2055
      %v2165 = vsel %vm983, %v2133, %v2057
      %v2166 = vsel %vm983, %v2134, %v2059
      %v2167 = vsel %vm983, %v2135, %v2061
      %v2168 = vsel %vm983, %v2136, %v2063
      %v2169 = vsel %vm983, %v2137, %v2065
      %v2170 = vsel %vm983, %v2138, %v2067
      %v2171 = vsel %vm983, %v2139, %v2069
      %v2172 = vsel %vm983, %v2140, %v2071
      %v2173 = vsel %vm983, %v2141, %v2073
      %v2174 = vsel %vm983, %v2142, %v2075
      %v2175 = vsel %vm983, %v2143, %v2077
      %v2176 = vsel %vm983, %v2144, %v2079
      %v2177 = vsel %vm983, %v2145, %v2081
      %v2178 = vpack.c.bf16 %v2147, %v2146
      %v2179 = vpack.c.bf16 %v2149, %v2148
      %v2180 = vpack.c.bf16 %v2151, %v2150
      %v2181 = vpack.c.bf16 %v2153, %v2152
      %v2182 = vpack.c.bf16 %v2155, %v2154
      %v2183 = vpack.c.bf16 %v2157, %v2156
      %v2184 = vpack.c.bf16 %v2159, %v2158
      %v2185 = vpack.c.bf16 %v2161, %v2160
      %v2186 = vpack.c.bf16 %v2163, %v2162
      %v2187 = vpack.c.bf16 %v2165, %v2164
      %v2188 = vpack.c.bf16 %v2167, %v2166
      %v2189 = vpack.c.bf16 %v2169, %v2168
      %v2190 = vpack.c.bf16 %v2171, %v2170
      %v2191 = vpack.c.bf16 %v2173, %v2172
      %v2192 = vpack.c.bf16 %v2175, %v2174
      %v2193 = vpack.c.bf16 %v2177, %v2176
      %s2194 = scalar_lea.vmem %s3, 16
      %v2195 = vld [vmem:[%s2194] sm:$0xf]
      %v2196 = vld [vmem:[%s2194 + $0x4] sm:$0x3]
      %v2199 = vunpack.c.l.b16 %v2195
      %v2200 = vunpack.c.l.b16 %v2196
      %v2201 = vpack.c.b16 %v2200, %v2199
      %v2203 = vsel %vm1474, %v2178, 0
      %v2206 = vsel %vm1474, %v2179, 0
      %v2209 = vsel %vm1474, %v2180, 0
      %v2212 = vsel %vm1474, %v2181, 0
      %v2215 = vsel %vm1474, %v2182, 0
      %v2218 = vsel %vm1474, %v2183, 0
      %v2221 = vsel %vm1474, %v2184, 0
      %v2224 = vsel %vm1474, %v2185, 0
      %v2227 = vsel %vm1474, %v2186, 0
      %v2230 = vsel %vm1474, %v2187, 0
      %v2233 = vsel %vm1474, %v2188, 0
      %v2236 = vsel %vm1474, %v2189, 0
      %v2239 = vsel %vm1474, %v2190, 0
      %v2242 = vsel %vm1474, %v2191, 0
      %v2245 = vsel %vm1474, %v2192, 0
      %v2248 = vsel %vm1474, %v2193, 0
      %v2251 = vsel %vm1523, %v2201, 0
      %2253 = vmatpush.bf16.msra.mxu0 0
      %2254 = vmatpush.bf16.msra.mxu0 0
      %2255 = vmatpush.bf16.msra.mxu0 0
      %2256 = vmatpush.bf16.msra.mxu0 0
      %2257 = vmatpush.bf16.msra.mxu0 0
      %2258 = vmatpush.bf16.msra.mxu0 0
      %2259 = vmatpush.bf16.msra.mxu0 0
      %2260 = vmatpush.bf16.msra.mxu0 %v2251
      %2261 = vmatmul.bf16.gmra.mxu0 %v2203
      %v2262 = vpop.f32.mrf.mxu0
      %v2263 = vadd.f32 0.0, %v2262
      %v2264 = vpop.f32.mrf.mxu0
      %v2265 = vadd.f32 0.0, %v2264
      %2266 = vmatmul.bf16.gmra.mxu0 %v2206
      %v2267 = vpop.f32.mrf.mxu0
      %v2268 = vadd.f32 0.0, %v2267
      %v2269 = vpop.f32.mrf.mxu0
      %v2270 = vadd.f32 0.0, %v2269
      %2271 = vmatmul.bf16.gmra.mxu0 %v2209
      %v2272 = vpop.f32.mrf.mxu0
      %v2273 = vadd.f32 0.0, %v2272
      %v2274 = vpop.f32.mrf.mxu0
      %v2275 = vadd.f32 0.0, %v2274
      %2276 = vmatmul.bf16.gmra.mxu0 %v2212
      %v2277 = vpop.f32.mrf.mxu0
      %v2278 = vadd.f32 0.0, %v2277
      %v2279 = vpop.f32.mrf.mxu0
      %v2280 = vadd.f32 0.0, %v2279
      %2281 = vmatmul.bf16.gmra.mxu0 %v2215
      %v2282 = vpop.f32.mrf.mxu0
      %v2283 = vadd.f32 0.0, %v2282
      %v2284 = vpop.f32.mrf.mxu0
      %v2285 = vadd.f32 0.0, %v2284
      %2286 = vmatmul.bf16.gmra.mxu0 %v2218
      %v2287 = vpop.f32.mrf.mxu0
      %v2288 = vadd.f32 0.0, %v2287
      %v2289 = vpop.f32.mrf.mxu0
      %v2290 = vadd.f32 0.0, %v2289
      %2291 = vmatmul.bf16.gmra.mxu0 %v2221
      %v2292 = vpop.f32.mrf.mxu0
      %v2293 = vadd.f32 0.0, %v2292
      %v2294 = vpop.f32.mrf.mxu0
      %v2295 = vadd.f32 0.0, %v2294
      %2296 = vmatmul.bf16.gmra.mxu0 %v2224
      %v2297 = vpop.f32.mrf.mxu0
      %v2298 = vadd.f32 0.0, %v2297
      %v2299 = vpop.f32.mrf.mxu0
      %v2300 = vadd.f32 0.0, %v2299
      %2301 = vmatmul.bf16.gmra.mxu0 %v2227
      %v2302 = vpop.f32.mrf.mxu0
      %v2303 = vadd.f32 0.0, %v2302
      %v2304 = vpop.f32.mrf.mxu0
      %v2305 = vadd.f32 0.0, %v2304
      %2306 = vmatmul.bf16.gmra.mxu0 %v2230
      %v2307 = vpop.f32.mrf.mxu0
      %v2308 = vadd.f32 0.0, %v2307
      %v2309 = vpop.f32.mrf.mxu0
      %v2310 = vadd.f32 0.0, %v2309
      %2311 = vmatmul.bf16.gmra.mxu0 %v2233
      %v2312 = vpop.f32.mrf.mxu0
      %v2313 = vadd.f32 0.0, %v2312
      %v2314 = vpop.f32.mrf.mxu0
      %v2315 = vadd.f32 0.0, %v2314
      %2316 = vmatmul.bf16.gmra.mxu0 %v2236
      %v2317 = vpop.f32.mrf.mxu0
      %v2318 = vadd.f32 0.0, %v2317
      %v2319 = vpop.f32.mrf.mxu0
      %v2320 = vadd.f32 0.0, %v2319
      %2321 = vmatmul.bf16.gmra.mxu0 %v2239
      %v2322 = vpop.f32.mrf.mxu0
      %v2323 = vadd.f32 0.0, %v2322
      %v2324 = vpop.f32.mrf.mxu0
      %v2325 = vadd.f32 0.0, %v2324
      %2326 = vmatmul.bf16.gmra.mxu0 %v2242
      %v2327 = vpop.f32.mrf.mxu0
      %v2328 = vadd.f32 0.0, %v2327
      %v2329 = vpop.f32.mrf.mxu0
      %v2330 = vadd.f32 0.0, %v2329
      %2331 = vmatmul.bf16.gmra.mxu0 %v2245
      %v2332 = vpop.f32.mrf.mxu0
      %v2333 = vadd.f32 0.0, %v2332
      %v2334 = vpop.f32.mrf.mxu0
      %v2335 = vadd.f32 0.0, %v2334
      %2336 = vmatmul.bf16.gmra.mxu0 %v2248
      %v2337 = vpop.f32.mrf.mxu0
      %v2338 = vadd.f32 0.0, %v2337
      %v2339 = vpop.f32.mrf.mxu0
      %v2340 = vadd.f32 0.0, %v2339
      %2341 = vdwg.mxu0
      %v2342 = vadd.f32 %v1682, %v2263
      %v2343 = vadd.f32 %v1684, %v2265
      %v2344 = vadd.f32 %v1687, %v2268
      %v2345 = vadd.f32 %v1689, %v2270
      %v2346 = vadd.f32 %v1692, %v2273
      %v2347 = vadd.f32 %v1694, %v2275
      %v2348 = vadd.f32 %v1697, %v2278
      %v2349 = vadd.f32 %v1699, %v2280
      %v2350 = vadd.f32 %v1702, %v2283
      %v2351 = vadd.f32 %v1704, %v2285
      %v2352 = vadd.f32 %v1707, %v2288
      %v2353 = vadd.f32 %v1709, %v2290
      %v2354 = vadd.f32 %v1712, %v2293
      %v2355 = vadd.f32 %v1714, %v2295
      %v2356 = vadd.f32 %v1717, %v2298
      %v2357 = vadd.f32 %v1719, %v2300
      %v2358 = vadd.f32 %v1722, %v2303
      %v2359 = vadd.f32 %v1724, %v2305
      %v2360 = vadd.f32 %v1727, %v2308
      %v2361 = vadd.f32 %v1729, %v2310
      %v2362 = vadd.f32 %v1732, %v2313
      %v2363 = vadd.f32 %v1734, %v2315
      %v2364 = vadd.f32 %v1737, %v2318
      %v2365 = vadd.f32 %v1739, %v2320
      %v2366 = vadd.f32 %v1742, %v2323
      %v2367 = vadd.f32 %v1744, %v2325
      %v2368 = vadd.f32 %v1747, %v2328
      %v2369 = vadd.f32 %v1749, %v2330
      %v2370 = vadd.f32 %v1752, %v2333
      %v2371 = vadd.f32 %v1754, %v2335
      %v2372 = vadd.f32 %v1757, %v2338
      %v2373 = vadd.f32 %v1759, %v2340
      %v2374 = vld [vmem:[%s4] sm:$0x1]
      %v2376 = vperm.slane %v2374, 0
      %v2378 = vadd.f32 %v2342, %v2376
      %v2379 = vadd.f32 %v2343, %v2376
      %v2380 = vadd.f32 %v2344, %v2376
      %v2381 = vadd.f32 %v2345, %v2376
      %v2382 = vadd.f32 %v2346, %v2376
      %v2383 = vadd.f32 %v2347, %v2376
      %v2384 = vadd.f32 %v2348, %v2376
      %v2385 = vadd.f32 %v2349, %v2376
      %v2386 = vadd.f32 %v2350, %v2376
      %v2387 = vadd.f32 %v2351, %v2376
      %v2388 = vadd.f32 %v2352, %v2376
      %v2389 = vadd.f32 %v2353, %v2376
      %v2390 = vadd.f32 %v2354, %v2376
      %v2391 = vadd.f32 %v2355, %v2376
      %v2392 = vadd.f32 %v2356, %v2376
      %v2393 = vadd.f32 %v2357, %v2376
      %v2394 = vadd.f32 %v2358, %v2376
      %v2395 = vadd.f32 %v2359, %v2376
      %v2396 = vadd.f32 %v2360, %v2376
      %v2397 = vadd.f32 %v2361, %v2376
      %v2398 = vadd.f32 %v2362, %v2376
      %v2399 = vadd.f32 %v2363, %v2376
      %v2400 = vadd.f32 %v2364, %v2376
      %v2401 = vadd.f32 %v2365, %v2376
      %v2402 = vadd.f32 %v2366, %v2376
      %v2403 = vadd.f32 %v2367, %v2376
      %v2404 = vadd.f32 %v2368, %v2376
      %v2405 = vadd.f32 %v2369, %v2376
      %v2406 = vadd.f32 %v2370, %v2376
      %v2407 = vadd.f32 %v2371, %v2376
      %v2408 = vadd.f32 %v2372, %v2376
      %v2409 = vadd.f32 %v2373, %v2376
      %v2410 = vmax.f32 %v2378, 0.0
      %v2411 = vmax.f32 %v2379, 0.0
      %v2412 = vmax.f32 %v2380, 0.0
      %v2413 = vmax.f32 %v2381, 0.0
      %v2414 = vmax.f32 %v2382, 0.0
      %v2415 = vmax.f32 %v2383, 0.0
      %v2416 = vmax.f32 %v2384, 0.0
      %v2417 = vmax.f32 %v2385, 0.0
      %v2418 = vmax.f32 %v2386, 0.0
      %v2419 = vmax.f32 %v2387, 0.0
      %v2420 = vmax.f32 %v2388, 0.0
      %v2421 = vmax.f32 %v2389, 0.0
      %v2422 = vmax.f32 %v2390, 0.0
      %v2423 = vmax.f32 %v2391, 0.0
      %v2424 = vmax.f32 %v2392, 0.0
      %v2425 = vmax.f32 %v2393, 0.0
      %v2426 = vmax.f32 %v2394, 0.0
      %v2427 = vmax.f32 %v2395, 0.0
      %v2428 = vmax.f32 %v2396, 0.0
      %v2429 = vmax.f32 %v2397, 0.0
      %v2430 = vmax.f32 %v2398, 0.0
      %v2431 = vmax.f32 %v2399, 0.0
      %v2432 = vmax.f32 %v2400, 0.0
      %v2433 = vmax.f32 %v2401, 0.0
      %v2434 = vmax.f32 %v2402, 0.0
      %v2435 = vmax.f32 %v2403, 0.0
      %v2436 = vmax.f32 %v2404, 0.0
      %v2437 = vmax.f32 %v2405, 0.0
      %v2438 = vmax.f32 %v2406, 0.0
      %v2439 = vmax.f32 %v2407, 0.0
      %v2440 = vmax.f32 %v2408, 0.0
      %v2441 = vmax.f32 %v2409, 0.0
      %v2442 = vpack.c.bf16 %v2411, %v2410
      %v2443 = vpack.c.bf16 %v2413, %v2412
      %v2444 = vpack.c.bf16 %v2415, %v2414
      %v2445 = vpack.c.bf16 %v2417, %v2416
      %v2446 = vpack.c.bf16 %v2419, %v2418
      %v2447 = vpack.c.bf16 %v2421, %v2420
      %v2448 = vpack.c.bf16 %v2423, %v2422
      %v2449 = vpack.c.bf16 %v2425, %v2424
      %v2450 = vpack.c.bf16 %v2427, %v2426
      %v2451 = vpack.c.bf16 %v2429, %v2428
      %v2452 = vpack.c.bf16 %v2431, %v2430
      %v2453 = vpack.c.bf16 %v2433, %v2432
      %v2454 = vpack.c.bf16 %v2435, %v2434
      %v2455 = vpack.c.bf16 %v2437, %v2436
      %v2456 = vpack.c.bf16 %v2439, %v2438
      %v2457 = vpack.c.bf16 %v2441, %v2440
      %v2458 = vld [vmem:[%s5] sm:$0x3]
      %v2459 = vld [vmem:[%s6] sm:$0x1]
      %v2461 = vperm.slane %v2459, 0
      %v2464 = vsel %vm510, %v2442, 0
      %v2467 = vsel %vm510, %v2443, 0
      %v2470 = vsel %vm510, %v2444, 0
      %v2473 = vsel %vm510, %v2445, 0
      %v2476 = vsel %vm510, %v2446, 0
      %v2479 = vsel %vm510, %v2447, 0
      %v2482 = vsel %vm510, %v2448, 0
      %v2485 = vsel %vm510, %v2449, 0
      %v2488 = vsel %vm510, %v2450, 0
      %v2491 = vsel %vm510, %v2451, 0
      %v2494 = vsel %vm510, %v2452, 0
      %v2497 = vsel %vm510, %v2453, 0
      %v2500 = vsel %vm510, %v2454, 0
      %v2503 = vsel %vm510, %v2455, 0
      %v2506 = vsel %vm510, %v2456, 0
      %v2509 = vsel %vm510, %v2457, 0
      %vm2511 = vcmask 1041408
      %v2513 = vsel %vm2511, %v2458, 0
      %2515 = vmatpush.bf16.msra.mxu0 0
      %2516 = vmatpush.bf16.msra.mxu0 0
      %2517 = vmatpush.bf16.msra.mxu0 0
      %2518 = vmatpush.bf16.msra.mxu0 0
      %2519 = vmatpush.bf16.msra.mxu0 0
      %2520 = vmatpush.bf16.msra.mxu0 0
      %2521 = vmatpush.bf16.msra.mxu0 0
      %2522 = vmatpush.bf16.msra.mxu0 %v2513
      %2523 = vmatmul.bf16.gmra.mxu0 %v2464
      %v2524 = vpop.f32.mrf.mxu0
      %v2525 = vadd.f32 %v2461, %v2524
      %v2526 = vpop.f32.mrf.mxu0
      %v2527 = vadd.f32 %v2461, %v2526
      %2528 = vmatmul.bf16.gmra.mxu0 %v2467
      %v2529 = vpop.f32.mrf.mxu0
      %v2530 = vadd.f32 %v2461, %v2529
      %v2531 = vpop.f32.mrf.mxu0
      %v2532 = vadd.f32 %v2461, %v2531
      %2533 = vmatmul.bf16.gmra.mxu0 %v2470
      %v2534 = vpop.f32.mrf.mxu0
      %v2535 = vadd.f32 %v2461, %v2534
      %v2536 = vpop.f32.mrf.mxu0
      %v2537 = vadd.f32 %v2461, %v2536
      %2538 = vmatmul.bf16.gmra.mxu0 %v2473
      %v2539 = vpop.f32.mrf.mxu0
      %v2540 = vadd.f32 %v2461, %v2539
      %v2541 = vpop.f32.mrf.mxu0
      %v2542 = vadd.f32 %v2461, %v2541
      %2543 = vmatmul.bf16.gmra.mxu0 %v2476
      %v2544 = vpop.f32.mrf.mxu0
      %v2545 = vadd.f32 %v2461, %v2544
      %v2546 = vpop.f32.mrf.mxu0
      %v2547 = vadd.f32 %v2461, %v2546
      %2548 = vmatmul.bf16.gmra.mxu0 %v2479
      %v2549 = vpop.f32.mrf.mxu0
      %v2550 = vadd.f32 %v2461, %v2549
      %v2551 = vpop.f32.mrf.mxu0
      %v2552 = vadd.f32 %v2461, %v2551
      %2553 = vmatmul.bf16.gmra.mxu0 %v2482
      %v2554 = vpop.f32.mrf.mxu0
      %v2555 = vadd.f32 %v2461, %v2554
      %v2556 = vpop.f32.mrf.mxu0
      %v2557 = vadd.f32 %v2461, %v2556
      %2558 = vmatmul.bf16.gmra.mxu0 %v2485
      %v2559 = vpop.f32.mrf.mxu0
      %v2560 = vadd.f32 %v2461, %v2559
      %v2561 = vpop.f32.mrf.mxu0
      %v2562 = vadd.f32 %v2461, %v2561
      %2563 = vmatmul.bf16.gmra.mxu0 %v2488
      %v2564 = vpop.f32.mrf.mxu0
      %v2565 = vadd.f32 %v2461, %v2564
      %v2566 = vpop.f32.mrf.mxu0
      %v2567 = vadd.f32 %v2461, %v2566
      %2568 = vmatmul.bf16.gmra.mxu0 %v2491
      %v2569 = vpop.f32.mrf.mxu0
      %v2570 = vadd.f32 %v2461, %v2569
      %v2571 = vpop.f32.mrf.mxu0
      %v2572 = vadd.f32 %v2461, %v2571
      %2573 = vmatmul.bf16.gmra.mxu0 %v2494
      %v2574 = vpop.f32.mrf.mxu0
      %v2575 = vadd.f32 %v2461, %v2574
      %v2576 = vpop.f32.mrf.mxu0
      %v2577 = vadd.f32 %v2461, %v2576
      %2578 = vmatmul.bf16.gmra.mxu0 %v2497
      %v2579 = vpop.f32.mrf.mxu0
      %v2580 = vadd.f32 %v2461, %v2579
      %v2581 = vpop.f32.mrf.mxu0
      %v2582 = vadd.f32 %v2461, %v2581
      %2583 = vmatmul.bf16.gmra.mxu0 %v2500
      %v2584 = vpop.f32.mrf.mxu0
      %v2585 = vadd.f32 %v2461, %v2584
      %v2586 = vpop.f32.mrf.mxu0
      %v2587 = vadd.f32 %v2461, %v2586
      %2588 = vmatmul.bf16.gmra.mxu0 %v2503
      %v2589 = vpop.f32.mrf.mxu0
      %v2590 = vadd.f32 %v2461, %v2589
      %v2591 = vpop.f32.mrf.mxu0
      %v2592 = vadd.f32 %v2461, %v2591
      %2593 = vmatmul.bf16.gmra.mxu0 %v2506
      %v2594 = vpop.f32.mrf.mxu0
      %v2595 = vadd.f32 %v2461, %v2594
      %v2596 = vpop.f32.mrf.mxu0
      %v2597 = vadd.f32 %v2461, %v2596
      %2598 = vmatmul.bf16.gmra.mxu0 %v2509
      %v2599 = vpop.f32.mrf.mxu0
      %v2600 = vadd.f32 %v2461, %v2599
      %v2601 = vpop.f32.mrf.mxu0
      %v2602 = vadd.f32 %v2461, %v2601
      %2603 = vdwg.mxu0
      %v2604 = vadd.f32 %v2525, %v280
      %v2605 = vadd.f32 %v2527, %v281
      %v2606 = vadd.f32 %v2530, %v282
      %v2607 = vadd.f32 %v2532, %v283
      %v2608 = vadd.f32 %v2535, %v284
      %v2609 = vadd.f32 %v2537, %v285
      %v2610 = vadd.f32 %v2540, %v286
      %v2611 = vadd.f32 %v2542, %v287
      %v2612 = vadd.f32 %v2545, %v288
      %v2613 = vadd.f32 %v2547, %v289
      %v2614 = vadd.f32 %v2550, %v290
      %v2615 = vadd.f32 %v2552, %v291
      %v2616 = vadd.f32 %v2555, %v292
      %v2617 = vadd.f32 %v2557, %v293
      %v2618 = vadd.f32 %v2560, %v294
      %v2619 = vadd.f32 %v2562, %v295
      %v2620 = vadd.f32 %v2565, %v296
      %v2621 = vadd.f32 %v2567, %v297
      %v2622 = vadd.f32 %v2570, %v298
      %v2623 = vadd.f32 %v2572, %v299
      %v2624 = vadd.f32 %v2575, %v300
      %v2625 = vadd.f32 %v2577, %v301
      %v2626 = vadd.f32 %v2580, %v302
      %v2627 = vadd.f32 %v2582, %v303
      %v2628 = vadd.f32 %v2585, %v304
      %v2629 = vadd.f32 %v2587, %v305
      %v2630 = vadd.f32 %v2590, %v306
      %v2631 = vadd.f32 %v2592, %v307
      %v2632 = vadd.f32 %v2595, %v308
      %v2633 = vadd.f32 %v2597, %v309
      %v2634 = vadd.f32 %v2600, %v310
      %v2635 = vadd.f32 %v2602, %v311
      %v2636 = vmax.f32 %v2604, 0.0
      %v2637 = vmax.f32 %v2605, 0.0
      %v2638 = vmax.f32 %v2606, 0.0
      %v2639 = vmax.f32 %v2607, 0.0
      %v2640 = vmax.f32 %v2608, 0.0
      %v2641 = vmax.f32 %v2609, 0.0
      %v2642 = vmax.f32 %v2610, 0.0
      %v2643 = vmax.f32 %v2611, 0.0
      %v2644 = vmax.f32 %v2612, 0.0
      %v2645 = vmax.f32 %v2613, 0.0
      %v2646 = vmax.f32 %v2614, 0.0
      %v2647 = vmax.f32 %v2615, 0.0
      %v2648 = vmax.f32 %v2616, 0.0
      %v2649 = vmax.f32 %v2617, 0.0
      %v2650 = vmax.f32 %v2618, 0.0
      %v2651 = vmax.f32 %v2619, 0.0
      %v2652 = vmax.f32 %v2620, 0.0
      %v2653 = vmax.f32 %v2621, 0.0
      %v2654 = vmax.f32 %v2622, 0.0
      %v2655 = vmax.f32 %v2623, 0.0
      %v2656 = vmax.f32 %v2624, 0.0
      %v2657 = vmax.f32 %v2625, 0.0
      %v2658 = vmax.f32 %v2626, 0.0
      %v2659 = vmax.f32 %v2627, 0.0
      %v2660 = vmax.f32 %v2628, 0.0
      %v2661 = vmax.f32 %v2629, 0.0
      %v2662 = vmax.f32 %v2630, 0.0
      %v2663 = vmax.f32 %v2631, 0.0
      %v2664 = vmax.f32 %v2632, 0.0
      %v2665 = vmax.f32 %v2633, 0.0
      %v2666 = vmax.f32 %v2634, 0.0
      %v2667 = vmax.f32 %v2635, 0.0
      %2668 = vst.msk [vmem:[%s278] sm:$0xff] %vm340, %v2636
      %2669 = vst.msk [vmem:[%s278 + $0x8] sm:$0xff] %vm340, %v2637
      %2670 = vst.msk [vmem:[%s278 + $0x10] sm:$0xff] %vm340, %v2638
      %2671 = vst.msk [vmem:[%s278 + $0x18] sm:$0xff] %vm340, %v2639
      %2672 = vst.msk [vmem:[%s278 + $0x20] sm:$0xff] %vm340, %v2640
      %2673 = vst.msk [vmem:[%s278 + $0x28] sm:$0xff] %vm340, %v2641
      %2674 = vst.msk [vmem:[%s278 + $0x30] sm:$0xff] %vm340, %v2642
      %2675 = vst.msk [vmem:[%s278 + $0x38] sm:$0xff] %vm340, %v2643
      %2676 = vst.msk [vmem:[%s278 + $0x40] sm:$0xff] %vm340, %v2644
      %2677 = vst.msk [vmem:[%s278 + $0x48] sm:$0xff] %vm340, %v2645
      %2678 = vst.msk [vmem:[%s278 + $0x50] sm:$0xff] %vm340, %v2646
      %2679 = vst.msk [vmem:[%s278 + $0x58] sm:$0xff] %vm340, %v2647
      %2680 = vst.msk [vmem:[%s278 + $0x60] sm:$0xff] %vm340, %v2648
      %2681 = vst.msk [vmem:[%s278 + $0x68] sm:$0xff] %vm340, %v2649
      %2682 = vst.msk [vmem:[%s278 + $0x70] sm:$0xff] %vm340, %v2650
      %2683 = vst.msk [vmem:[%s278 + $0x78] sm:$0xff] %vm340, %v2651
      %2684 = vst.msk [vmem:[%s278 + $0x80] sm:$0xff] %vm340, %v2652
      %2685 = vst.msk [vmem:[%s278 + $0x88] sm:$0xff] %vm340, %v2653
      %2686 = vst.msk [vmem:[%s278 + $0x90] sm:$0xff] %vm340, %v2654
      %2687 = vst.msk [vmem:[%s278 + $0x98] sm:$0xff] %vm340, %v2655
      %2688 = vst.msk [vmem:[%s278 + $0xa0] sm:$0xff] %vm340, %v2656
      %2689 = vst.msk [vmem:[%s278 + $0xa8] sm:$0xff] %vm340, %v2657
      %2690 = vst.msk [vmem:[%s278 + $0xb0] sm:$0xff] %vm340, %v2658
      %2691 = vst.msk [vmem:[%s278 + $0xb8] sm:$0xff] %vm340, %v2659
      %2692 = vst.msk [vmem:[%s278 + $0xc0] sm:$0xff] %vm340, %v2660
      %2693 = vst.msk [vmem:[%s278 + $0xc8] sm:$0xff] %vm340, %v2661
      %2694 = vst.msk [vmem:[%s278 + $0xd0] sm:$0xff] %vm340, %v2662
      %2695 = vst.msk [vmem:[%s278 + $0xd8] sm:$0xff] %vm340, %v2663
      %2696 = vst.msk [vmem:[%s278 + $0xe0] sm:$0xff] %vm340, %v2664
      %2697 = vst.msk [vmem:[%s278 + $0xe8] sm:$0xff] %vm340, %v2665
      %2698 = vst.msk [vmem:[%s278 + $0xf0] sm:$0xff] %vm340, %v2666
      %2699 = vst.msk [vmem:[%s278 + $0xf8] sm:$0xff] %vm340, %v2667
      %p2700 = scmp.lt.s32.totalorder %s18, 1
      %s2701 = scalar_select %p2700, %s18, 1
      %s2702 = smul.addr %s2701, 32
      %s2703 = smul.addr %s2702, 8
      %s2704 = scalar_lea.vmem %s7, %s2703
      // Predicated region
      $region49: #{block_forward.1} parent=47 // pred_check
        %p2705 = pneg %p188
      $region50: #{block_forward.1} parent=47 // pred_check_branch
        %2707 = sbr.rel (%p2705) target = $region52
      $region51: #{block_forward.1} parent=47 // pred_region
        _
      $region52: #{block_forward.1} parent=47 // pred_fallthru
        _
    $region48: #{block_forward.1} parent=5 // pred_fallthru
      _
    %p2708 = scmp.le.s32.totalorder 2, %s13
    // Predicated region
    $region53: #{block_forward.1} parent=5 // pred_check
      %p2709 = pneg %p2708
    $region54: #{block_forward.1} parent=5 // pred_check_branch
      %2711 = sbr.rel (%p2709) target = $region56
    $region55: #{block_forward.1} parent=5 // pred_region
      %s2712 = ssub.s32 %s13, 2
      // Predicated region
      $region57: #{block_forward.1} parent=55 // pred_check
        %p2713 = pneg %p194
      $region58: #{block_forward.1} parent=55 // pred_check_branch
        %2715 = sbr.rel (%p2713) target = $region60
      $region59: #{block_forward.1} parent=55 // pred_region
        %p2716 = scmp.lt.s32.totalorder %s19, 1
        %s2717 = scalar_select %p2716, %s19, 1
        %s2718 = smul.addr %s2717, 32
        %s2719 = smul.addr %s2718, 8
        %s2720 = scalar_lea.vmem %s7, %s2719
      $region60: #{block_forward.1} parent=55 // pred_fallthru
        _
    $region56: #{block_forward.1} parent=5 // pred_fallthru
      _
  $region6: #{block_forward.1} parent=0 // loop_footer
    %s17 = sadd.s32 1, %s13
  $region7: #{block_forward.1} parent=0 // loop_footer_branch
    %12 = sbr.rel target = $region3
  $region8: #{block_forward.1} parent=0 // loop_exit
    _

</llo_original>
